<compile_context>
chip_gen: v6e
topology: v6e:2x2x1
jax: 0.10.0
libtpu: 0.0.40
codegen_flags: <defaults>
</compile_context>

<pallas_src>
import math
from functools import lru_cache, partial

import jax
import jax.numpy as jnp
from jax.experimental import pallas as pl
from jax.experimental.pallas import tpu as pltpu


# ----------------------------------------------------------------------------
# Kernel: one SAGEConv('mean') layer, grid = (row panels, neighbor K panels).
# ----------------------------------------------------------------------------
def sage_layer_kernel(a_ref, xk_ref, xself_ref, invdeg_ref, ws_ref, wn_ref,
                      b_ref, out_ref, acc_ref, *, apply_relu):
    """One fused SAGEConv('mean') layer.

    a_ref      : (block_rows, tk)    bf16  A panel (0/1 adjacency, exact)
    xk_ref     : (tk, F_pad)         bf16  neighbor-feature K panel
    xself_ref  : (block_rows, F_pad) bf16  self features for this row panel
    invdeg_ref : (block_rows, 1)     f32   1 / max(in_degree, 1)
    ws_ref     : (F_pad, H_pad)      bf16  W_self   (grid-invariant)
    wn_ref     : (F_pad, H_pad)      bf16  W_neigh  (grid-invariant)
    b_ref      : (1, H_pad)          f32   bias     (grid-invariant)
    out_ref    : (block_rows, H_pad) out dtype (bf16 for layer 1, f32 for layer 2)
    acc_ref    : (block_rows, F_pad) f32   neighbor-sum accumulator scratch
    """
    k = pl.program_id(1)

    @pl.when(k == 0)
    def _():
        acc_ref[...] = jnp.zeros_like(acc_ref)

    # bf16 x bf16 -> f32 MXU accumulation over the neighbor (K) axis.
    acc_ref[...] += jnp.dot(a_ref[...], xk_ref[...],
                            preferred_element_type=jnp.float32)

    @pl.when(k == pl.num_programs(1) - 1)
    def _():
        # Mean aggregation: scale the neighbor sum once per output tile.
        neigh = acc_ref[...] * invdeg_ref[...]                  # (TM, F_pad) f32
        # Self + neighbor transforms: two bf16 MXU matmuls, f32 accumulation.
        h = jnp.dot(xself_ref[...], ws_ref[...],
                    preferred_element_type=jnp.float32)
        h = h + jnp.dot(neigh.astype(jnp.bfloat16), wn_ref[...],
                        preferred_element_type=jnp.float32)
        h = h + b_ref[...]
        if apply_relu:
            h = jnp.maximum(h, 0.0)
        out_ref[...] = h.astype(out_ref.dtype)


# ----------------------------------------------------------------------------
# Wrappers
# ----------------------------------------------------------------------------
def _round_up(x, m):
    return ((x + m - 1) // m) * m


def _pad2(a, rows, cols):
    return jnp.pad(a, ((0, rows - a.shape[0]), (0, cols - a.shape[1])))


def _spec(shape, index_map, buffer_count=None):
    """BlockSpec; optionally request explicit buffering if Pallas supports it."""
    if buffer_count is not None:
        try:
            return pl.BlockSpec(shape, index_map,
                                pipeline_mode=pl.Buffered(buffer_count))
        except (TypeError, AttributeError):
            pass  # older Pallas: fall back to default double buffering
    return pl.BlockSpec(shape, index_map)


@lru_cache(maxsize=None)
def _vmem_limit_bytes():
    try:
        cap = pltpu.get_tpu_info().vmem_capacity_bytes
        return min(int(cap * 0.7), 100 << 20)   # safe on v7x (64 MiB) and v5e/v6e
    except Exception as e:  # noqa: BLE001
        print(f"WARNING: pltpu.get_tpu_info() failed ({e!r}); "
              "using the compiler's default scoped-VMEM limit")
        return None


def _compiler_params():
    kwargs = dict(dimension_semantics=("parallel", "arbitrary"))
    limit = _vmem_limit_bytes()
    if limit is not None:
        kwargs["vmem_limit_bytes"] = limit
    return pltpu.CompilerParams(**kwargs)


def _sage_layer(a_bf16, x_bf16, inv_deg, w_self, w_neigh, bias,
                *, block_rows, tk, apply_relu, out_dtype):
    n_pad = a_bf16.shape[0]
    f_pad = x_bf16.shape[1]
    h_pad = w_self.shape[1]
    grid = (n_pad // block_rows, n_pad // tk)

    flops = 2 * n_pad * n_pad * f_pad + 2 * 2 * n_pad * f_pad * h_pad
    bytes_accessed = (a_bf16.size * 2 + 2 * x_bf16.size * 2 + inv_deg.size * 4
                      + (w_self.size + w_neigh.size) * 2 + bias.size * 4
                      + n_pad * h_pad * jnp.dtype(out_dtype).itemsize)

    def build_and_call(single_buffer_consts):
        const_buf = 1 if single_buffer_consts else None
        return pl.pallas_call(
            partial(sage_layer_kernel, apply_relu=apply_relu),
            out_shape=jax.ShapeDtypeStruct((n_pad, h_pad), out_dtype),
            grid=grid,
            in_specs=[
                _spec((block_rows, tk),    lambda i, k: (i, k)),   # A panel (streams)
                _spec((tk, f_pad),         lambda i, k: (k, 0)),   # X K-panel (agg)
                _spec((block_rows, f_pad), lambda i, k: (i, 0)),   # X self rows
                _spec((block_rows, 1),     lambda i, k: (i, 0)),   # inv_degree
                _spec((f_pad, h_pad), lambda i, k: (0, 0), buffer_count=const_buf),
                _spec((f_pad, h_pad), lambda i, k: (0, 0), buffer_count=const_buf),
                _spec((1, h_pad),     lambda i, k: (0, 0), buffer_count=const_buf),
            ],
            out_specs=pl.BlockSpec((block_rows, h_pad), lambda i, k: (i, 0)),
            scratch_shapes=[pltpu.VMEM((block_rows, f_pad), jnp.float32)],
            compiler_params=_compiler_params(),
            cost_estimate=pl.CostEstimate(flops=int(flops), transcendentals=0,
                                          bytes_accessed=int(bytes_accessed)),
        )(a_bf16, x_bf16, x_bf16, inv_deg, w_self, w_neigh, bias)

    try:
        return build_and_call(True)
    except Exception as e:  # noqa: BLE001
        print("WARNING: retrying layer without pl.Buffered(1) single-buffering "
              f"({type(e).__name__})")
        return build_and_call(False)


def graphsage_forward(adj, x, params, *, block_rows=128, tk=128):
    """2-layer GraphSAGE forward (eval mode): conv1 -> ReLU -> (dropout=id) -> conv2.

    block_rows: keep 128 on v5e; sweep 256 on v6e/v7x (2x256^2 MXU), keeping the
    row-panel grid length >= 2 and even so the "parallel" axis splits across TCs.
    """
    ws1, wn1, b1, ws2, wn2, b2 = params
    n, f_in = x.shape
    h_feats = ws1.shape[1]
    f_out = ws2.shape[1]

    # ---- pad: nodes to lcm(block_rows, tk); features to multiples of 128 ----
    n_pad = _round_up(n, math.lcm(block_rows, tk))
    f_in_p = _round_up(f_in, 128)
    h_p = _round_up(h_feats, 128)
    f_out_p = _round_up(f_out, 128)

    adj_p = _pad2(adj.astype(jnp.float32), n_pad, n_pad)   # padded rows/cols = 0
    deg = jnp.sum(adj_p, axis=1, keepdims=True)
    inv_deg = 1.0 / jnp.maximum(deg, 1.0)                  # f32 (n_pad, 1)
    a_bf16 = adj_p.astype(jnp.bfloat16)                    # exact for 0/1 entries

    x_bf16 = _pad2(x.astype(jnp.float32), n_pad, f_in_p).astype(jnp.bfloat16)

    ws1_p = _pad2(ws1, f_in_p, h_p).astype(jnp.bfloat16)
    wn1_p = _pad2(wn1, f_in_p, h_p).astype(jnp.bfloat16)
    b1_p = _pad2(b1, 1, h_p)
    ws2_p = _pad2(ws2, h_p, f_out_p).astype(jnp.bfloat16)
    wn2_p = _pad2(wn2, h_p, f_out_p).astype(jnp.bfloat16)
    b2_p = _pad2(b2, 1, f_out_p)

    # ---- layer 1: SAGEConv(in->h) + ReLU (+ eval-mode dropout = identity) ----
    h1 = _sage_layer(a_bf16, x_bf16, inv_deg, ws1_p, wn1_p, b1_p,
                     block_rows=block_rows, tk=tk, apply_relu=True,
                     out_dtype=jnp.bfloat16)
    # ---- layer 2: SAGEConv(h->out), consumes bf16 h1 directly ----
    out = _sage_layer(a_bf16, h1, inv_deg, ws2_p, wn2_p, b2_p,
                      block_rows=block_rows, tk=tk, apply_relu=False,
                      out_dtype=jnp.float32)
    return out[:n, :f_out]


# ----------------------------------------------------------------------------
# Params / references
# ----------------------------------------------------------------------------
def init_params(key, in_feats, h_feats, out_feats):
    ks = jax.random.split(key, 4)

    def glorot(k, fan_in, fan_out):
        lim = (6.0 / (fan_in + fan_out)) ** 0.5
        return jax.random.uniform(k, (fan_in, fan_out), jnp.float32, -lim, lim)

    ws1 = glorot(ks[0], in_feats, h_feats)
    wn1 = glorot(ks[1], in_feats, h_feats)
    b1 = jnp.zeros((1, h_feats), jnp.float32)
    ws2 = glorot(ks[2], h_feats, out_feats)
    wn2 = glorot(ks[3], h_feats, out_feats)
    b2 = jnp.zeros((1, out_feats), jnp.float32)
    return ws1, wn1, b1, ws2, wn2, b2


def reference_forward(adj, x, params):
    """Plain-JAX f32 reference matching the PyTorch/DGL forward (eval mode)."""
    ws1, wn1, b1, ws2, wn2, b2 = params
    deg = jnp.sum(adj, axis=1, keepdims=True)
    a_norm = adj / jnp.maximum(deg, 1.0)
    h = x @ ws1 + (a_norm @ x) @ wn1 + b1
    h = jnp.maximum(h, 0.0)
    return h @ ws2 + (a_norm @ h) @ wn2 + b2


def reference_forward_bf16(adj, x, params):
    """Reference mimicking the kernel's bf16 quantization points (f32 accumulation)."""
    ws1, wn1, b1, ws2, wn2, b2 = params

    def q(a):  # round-trip through bf16
        return a.astype(jnp.bfloat16).astype(jnp.float32)

    deg = jnp.sum(adj, axis=1, keepdims=True)
    inv_deg = 1.0 / jnp.maximum(deg, 1.0)

    def layer(h_in, ws, wn, b, relu):
        neigh = q((adj @ q(h_in)) * inv_deg)
        out = q(h_in) @ q(ws) + neigh @ q(wn) + b
        return jnp.maximum(out, 0.0) if relu else out

    h1 = layer(x, ws1, wn1, b1, True)
    return layer(q(h1), ws2, wn2, b2, False)   # layer 2 consumes bf16 h1


if __name__ == "__main__":
    key = jax.random.PRNGKey(0)
    k_adj, k_x, k_p = jax.random.split(key, 3)

    N = 32
    IN_FEATS = 16
    H_FEATS = 32
    OUT_FEATS = 8

    # deterministic random directed graph (dense 0/1 adjacency, ~25% density, no self loops)
    adj = (jax.random.uniform(k_adj, (N, N)) < 0.25).astype(jnp.float32)
    adj = adj * (1.0 - jnp.eye(N, dtype=jnp.float32))
    x = jax.random.normal(k_x, (N, IN_FEATS), jnp.float32)

    params = init_params(k_p, IN_FEATS, H_FEATS, OUT_FEATS)

    out = graphsage_forward(adj, x, params)
    out = jax.block_until_ready(out)
    assert out.shape == (N, OUT_FEATS), out.shape

    # Tight check: kernel math vs a reference with identical bf16 quantization points.
    ref_q = reference_forward_bf16(adj, x, params)
    assert jnp.allclose(out, ref_q, atol=5e-3, rtol=5e-3), \
        "mismatch vs bf16-quantized reference"

    # Loose sanity check: semantics vs the pure-f32 PyTorch/DGL forward.
    ref = reference_forward(adj, x, params)
    assert jnp.allclose(out, ref, atol=1e-1, rtol=1e-1), \
        "mismatch vs f32 reference (bf16 quantization drift too large)"

    print("KERNEL_OK")
</pallas_src>

<mosaic_0001>
module attributes {stable_mosaic.version = 11 : i64} {
  func.func @sage_layer_kernel(%arg0: i32, %arg1: i32, %arg2: memref<128x128xbf16, #tpu.memory_space<vmem>>, %arg3: memref<128x128xbf16, #tpu.memory_space<vmem>>, %arg4: memref<128x128xbf16, #tpu.memory_space<vmem>>, %arg5: memref<128x1xf32, #tpu.memory_space<vmem>>, %arg6: memref<128x128xbf16, #tpu.memory_space<vmem>>, %arg7: memref<128x128xbf16, #tpu.memory_space<vmem>>, %arg8: memref<1x128xf32, #tpu.memory_space<vmem>>, %arg9: memref<128x128xbf16, #tpu.memory_space<vmem>>, %arg10: memref<128x128xf32, #tpu.memory_space<vmem>>) attributes {dimension_semantics = [#tpu.dimension_semantics<parallel>, #tpu.dimension_semantics<arbitrary>], iteration_bounds = array<i64: 1, 1>, scalar_prefetch = 0 : i64, scratch_operands = 1 : i64, tpu.core_type = #tpu.core_type<tc>, window_params = [{transform_indices = @transform_0, window_bounds = array<i64: 128, 128>}, {transform_indices = @transform_1, window_bounds = array<i64: 128, 128>}, {transform_indices = @transform_2, window_bounds = array<i64: 128, 128>}, {transform_indices = @transform_3, window_bounds = array<i64: 128, 1>}, {pipeline_mode = #tpu.pipeline_mode<synchronous>, transform_indices = @transform_4, window_bounds = array<i64: 128, 128>}, {pipeline_mode = #tpu.pipeline_mode<synchronous>, transform_indices = @transform_5, window_bounds = array<i64: 128, 128>}, {pipeline_mode = #tpu.pipeline_mode<synchronous>, transform_indices = @transform_6, window_bounds = array<i64: 1, 128>}, {transform_indices = @transform_7, window_bounds = array<i64: 128, 128>}]} {
    %c0_i32 = arith.constant 0 : i32
    %0 = arith.cmpi eq, %arg1, %c0_i32 : i32
    %1 = arith.extui %0 : i1 to i32
    %c0_i32_0 = arith.constant 0 : i32
    %2 = arith.cmpi ne, %1, %c0_i32_0 : i32
    scf.if %2 {
      %cst_10 = arith.constant 0.000000e+00 : f32
      %12 = vector.broadcast %cst_10 : f32 to vector<128x128xf32>
      %c0_11 = arith.constant 0 : index
      %c0_12 = arith.constant 0 : index
      %13 = vector.load %arg10[%c0_11, %c0_12] : memref<128x128xf32, #tpu.memory_space<vmem>>, vector<128x128xf32>
      tpu.vector_store %arg10[%c0_11, %c0_12], %12 {strides = array<i32>} : memref<128x128xf32, #tpu.memory_space<vmem>>, vector<128x128xf32>,
    } else {
    }
    %c0 = arith.constant 0 : index
    %c0_1 = arith.constant 0 : index
    %3 = vector.load %arg10[%c0, %c0_1] : memref<128x128xf32, #tpu.memory_space<vmem>>, vector<128x128xf32>
    %c0_2 = arith.constant 0 : index
    %c0_3 = arith.constant 0 : index
    %4 = vector.load %arg2[%c0_2, %c0_3] : memref<128x128xbf16, #tpu.memory_space<vmem>>, vector<128x128xbf16>
    %c0_4 = arith.constant 0 : index
    %c0_5 = arith.constant 0 : index
    %5 = vector.load %arg3[%c0_4, %c0_5] : memref<128x128xbf16, #tpu.memory_space<vmem>>, vector<128x128xbf16>
    %cst = arith.constant dense<0.000000e+00> : vector<128x128xf32>
    %6 = tpu.matmul %4, %5, %cst {dimension_numbers = #tpu.dot_dimension_numbers<[1], [0], [0], [1], [0, 0, 1, 1], [], []>} : vector<128x128xbf16>, vector<128x128xbf16>, vector<128x128xf32> -> vector<128x128xf32>
    %7 = arith.addf %3, %6 : vector<128x128xf32>
    %c0_6 = arith.constant 0 : index
    %c0_7 = arith.constant 0 : index
    %8 = vector.load %arg10[%c0_6, %c0_7] : memref<128x128xf32, #tpu.memory_space<vmem>>, vector<128x128xf32>
    tpu.vector_store %arg10[%c0_6, %c0_7], %7 {strides = array<i32>} : memref<128x128xf32, #tpu.memory_space<vmem>>, vector<128x128xf32>,
    %c0_i32_8 = arith.constant 0 : i32
    %9 = arith.cmpi eq, %arg1, %c0_i32_8 : i32
    %10 = arith.extui %9 : i1 to i32
    %c0_i32_9 = arith.constant 0 : i32
    %11 = arith.cmpi ne, %10, %c0_i32_9 : i32
    scf.if %11 {
      %c0_10 = arith.constant 0 : index
      %c0_11 = arith.constant 0 : index
      %12 = vector.load %arg10[%c0_10, %c0_11] : memref<128x128xf32, #tpu.memory_space<vmem>>, vector<128x128xf32>
      %c0_12 = arith.constant 0 : index
      %c0_13 = arith.constant 0 : index
      %13 = vector.load %arg5[%c0_12, %c0_13] : memref<128x1xf32, #tpu.memory_space<vmem>>, vector<128x1xf32>
      %14 = vector.broadcast %13 : vector<128x1xf32> to vector<128x128xf32>
      %15 = arith.mulf %12, %14 : vector<128x128xf32>
      %c0_14 = arith.constant 0 : index
      %c0_15 = arith.constant 0 : index
      %16 = vector.load %arg4[%c0_14, %c0_15] : memref<128x128xbf16, #tpu.memory_space<vmem>>, vector<128x128xbf16>
      %c0_16 = arith.constant 0 : index
      %c0_17 = arith.constant 0 : index
      %17 = vector.load %arg6[%c0_16, %c0_17] : memref<128x128xbf16, #tpu.memory_space<vmem>>, vector<128x128xbf16>
      %cst_18 = arith.constant dense<0.000000e+00> : vector<128x128xf32>
      %18 = tpu.matmul %16, %17, %cst_18 {dimension_numbers = #tpu.dot_dimension_numbers<[1], [0], [0], [1], [0, 0, 1, 1], [], []>} : vector<128x128xbf16>, vector<128x128xbf16>, vector<128x128xf32> -> vector<128x128xf32>
      %19 = arith.truncf %15 : vector<128x128xf32> to vector<128x128xbf16>
      %c0_19 = arith.constant 0 : index
      %c0_20 = arith.constant 0 : index
      %20 = vector.load %arg7[%c0_19, %c0_20] : memref<128x128xbf16, #tpu.memory_space<vmem>>, vector<128x128xbf16>
      %cst_21 = arith.constant dense<0.000000e+00> : vector<128x128xf32>
      %21 = tpu.matmul %19, %20, %cst_21 {dimension_numbers = #tpu.dot_dimension_numbers<[1], [0], [0], [1], [0, 0, 1, 1], [], []>} : vector<128x128xbf16>, vector<128x128xbf16>, vector<128x128xf32> -> vector<128x128xf32>
      %22 = arith.addf %18, %21 : vector<128x128xf32>
      %c0_22 = arith.constant 0 : index
      %c0_23 = arith.constant 0 : index
      %23 = vector.load %arg8[%c0_22, %c0_23] : memref<1x128xf32, #tpu.memory_space<vmem>>, vector<1x128xf32>
      %24 = vector.broadcast %23 : vector<1x128xf32> to vector<128x128xf32>
      %25 = arith.addf %22, %24 : vector<128x128xf32>
      %cst_24 = arith.constant 0.000000e+00 : f32
      %26 = vector.broadcast %cst_24 : f32 to vector<128x128xf32>
      %27 = arith.maximumf %25, %26 : vector<128x128xf32>
      %28 = arith.truncf %27 : vector<128x128xf32> to vector<128x128xbf16>
      %c0_25 = arith.constant 0 : index
      %c0_26 = arith.constant 0 : index
      %29 = vector.load %arg9[%c0_25, %c0_26] : memref<128x128xbf16, #tpu.memory_space<vmem>>, vector<128x128xbf16>
      tpu.vector_store %arg9[%c0_25, %c0_26], %28 {strides = array<i32>} : memref<128x128xbf16, #tpu.memory_space<vmem>>, vector<128x128xbf16>,
    } else {
    }
    return
  }
  func.func @transform_0(%arg0: i32, %arg1: i32) -> (i32, i32) {
    %c0_i32 = arith.constant 0 : i32
    return %arg0, %arg1 : i32, i32
  }
  func.func @transform_1(%arg0: i32, %arg1: i32) -> (i32, i32) {
    %c0_i32 = arith.constant 0 : i32
    %c0_i32_0 = arith.constant 0 : i32
    return %arg1, %c0_i32 : i32, i32
  }
  func.func @transform_2(%arg0: i32, %arg1: i32) -> (i32, i32) {
    %c0_i32 = arith.constant 0 : i32
    %c0_i32_0 = arith.constant 0 : i32
    return %arg0, %c0_i32 : i32, i32
  }
  func.func @transform_3(%arg0: i32, %arg1: i32) -> (i32, i32) {
    %c0_i32 = arith.constant 0 : i32
    %c0_i32_0 = arith.constant 0 : i32
    return %arg0, %c0_i32 : i32, i32
  }
  func.func @transform_4(%arg0: i32, %arg1: i32) -> (i32, i32) {
    %c0_i32 = arith.constant 0 : i32
    %c0_i32_0 = arith.constant 0 : i32
    %c0_i32_1 = arith.constant 0 : i32
    return %c0_i32, %c0_i32_0 : i32, i32
  }
  func.func @transform_5(%arg0: i32, %arg1: i32) -> (i32, i32) {
    %c0_i32 = arith.constant 0 : i32
    %c0_i32_0 = arith.constant 0 : i32
    %c0_i32_1 = arith.constant 0 : i32
    return %c0_i32, %c0_i32_0 : i32, i32
  }
  func.func @transform_6(%arg0: i32, %arg1: i32) -> (i32, i32) {
    %c0_i32 = arith.constant 0 : i32
    %c0_i32_0 = arith.constant 0 : i32
    %c0_i32_1 = arith.constant 0 : i32
    return %c0_i32, %c0_i32_0 : i32, i32
  }
  func.func @transform_7(%arg0: i32, %arg1: i32) -> (i32, i32) {
    %c0_i32 = arith.constant 0 : i32
    %c0_i32_0 = arith.constant 0 : i32
    return %arg0, %c0_i32 : i32, i32
  }
}

module attributes {stable_mosaic.version = 11 : i64} {
  func.func @sage_layer_kernel(%arg0: i32, %arg1: i32, %arg2: memref<128x128xbf16, #tpu.memory_space<vmem>>, %arg3: memref<128x128xbf16, #tpu.memory_space<vmem>>, %arg4: memref<128x128xbf16, #tpu.memory_space<vmem>>, %arg5: memref<128x1xf32, #tpu.memory_space<vmem>>, %arg6: memref<128x128xbf16, #tpu.memory_space<vmem>>, %arg7: memref<128x128xbf16, #tpu.memory_space<vmem>>, %arg8: memref<1x128xf32, #tpu.memory_space<vmem>>, %arg9: memref<128x128xbf16, #tpu.memory_space<vmem>>, %arg10: memref<128x128xf32, #tpu.memory_space<vmem>>) attributes {dimension_semantics = [#tpu.dimension_semantics<parallel>, #tpu.dimension_semantics<arbitrary>], iteration_bounds = array<i64: 1, 1>, scalar_prefetch = 0 : i64, scratch_operands = 1 : i64, tpu.core_type = #tpu.core_type<tc>, window_params = [{transform_indices = @transform_0, window_bounds = array<i64: 128, 128>}, {transform_indices = @transform_1, window_bounds = array<i64: 128, 128>}, {transform_indices = @transform_2, window_bounds = array<i64: 128, 128>}, {transform_indices = @transform_3, window_bounds = array<i64: 128, 1>}, {pipeline_mode = #tpu.pipeline_mode<synchronous>, transform_indices = @transform_4, window_bounds = array<i64: 128, 128>}, {pipeline_mode = #tpu.pipeline_mode<synchronous>, transform_indices = @transform_5, window_bounds = array<i64: 128, 128>}, {pipeline_mode = #tpu.pipeline_mode<synchronous>, transform_indices = @transform_6, window_bounds = array<i64: 1, 128>}, {transform_indices = @transform_7, window_bounds = array<i64: 128, 128>}]} {
    %c0_i32 = arith.constant 0 : i32
    %0 = arith.cmpi eq, %arg1, %c0_i32 : i32
    %1 = arith.extui %0 : i1 to i32
    %c0_i32_0 = arith.constant 0 : i32
    %2 = arith.cmpi ne, %1, %c0_i32_0 : i32
    scf.if %2 {
      %cst_10 = arith.constant 0.000000e+00 : f32
      %12 = vector.broadcast %cst_10 : f32 to vector<128x128xf32>
      %c0_11 = arith.constant 0 : index
      %c0_12 = arith.constant 0 : index
      %13 = vector.load %arg10[%c0_11, %c0_12] : memref<128x128xf32, #tpu.memory_space<vmem>>, vector<128x128xf32>
      tpu.vector_store %arg10[%c0_11, %c0_12], %12 {strides = array<i32>} : memref<128x128xf32, #tpu.memory_space<vmem>>, vector<128x128xf32>,
    } else {
    }
    %c0 = arith.constant 0 : index
    %c0_1 = arith.constant 0 : index
    %3 = vector.load %arg10[%c0, %c0_1] : memref<128x128xf32, #tpu.memory_space<vmem>>, vector<128x128xf32>
    %c0_2 = arith.constant 0 : index
    %c0_3 = arith.constant 0 : index
    %4 = vector.load %arg2[%c0_2, %c0_3] : memref<128x128xbf16, #tpu.memory_space<vmem>>, vector<128x128xbf16>
    %c0_4 = arith.constant 0 : index
    %c0_5 = arith.constant 0 : index
    %5 = vector.load %arg3[%c0_4, %c0_5] : memref<128x128xbf16, #tpu.memory_space<vmem>>, vector<128x128xbf16>
    %cst = arith.constant dense<0.000000e+00> : vector<128x128xf32>
    %6 = tpu.matmul %4, %5, %cst {dimension_numbers = #tpu.dot_dimension_numbers<[1], [0], [0], [1], [0, 0, 1, 1], [], []>} : vector<128x128xbf16>, vector<128x128xbf16>, vector<128x128xf32> -> vector<128x128xf32>
    %7 = arith.addf %3, %6 : vector<128x128xf32>
    %c0_6 = arith.constant 0 : index
    %c0_7 = arith.constant 0 : index
    %8 = vector.load %arg10[%c0_6, %c0_7] : memref<128x128xf32, #tpu.memory_space<vmem>>, vector<128x128xf32>
    tpu.vector_store %arg10[%c0_6, %c0_7], %7 {strides = array<i32>} : memref<128x128xf32, #tpu.memory_space<vmem>>, vector<128x128xf32>,
    %c0_i32_8 = arith.constant 0 : i32
    %9 = arith.cmpi eq, %arg1, %c0_i32_8 : i32
    %10 = arith.extui %9 : i1 to i32
    %c0_i32_9 = arith.constant 0 : i32
    %11 = arith.cmpi ne, %10, %c0_i32_9 : i32
    scf.if %11 {
      %c0_10 = arith.constant 0 : index
      %c0_11 = arith.constant 0 : index
      %12 = vector.load %arg10[%c0_10, %c0_11] : memref<128x128xf32, #tpu.memory_space<vmem>>, vector<128x128xf32>
      %c0_12 = arith.constant 0 : index
      %c0_13 = arith.constant 0 : index
      %13 = vector.load %arg5[%c0_12, %c0_13] : memref<128x1xf32, #tpu.memory_space<vmem>>, vector<128x1xf32>
      %14 = vector.broadcast %13 : vector<128x1xf32> to vector<128x128xf32>
      %15 = arith.mulf %12, %14 : vector<128x128xf32>
      %c0_14 = arith.constant 0 : index
      %c0_15 = arith.constant 0 : index
      %16 = vector.load %arg4[%c0_14, %c0_15] : memref<128x128xbf16, #tpu.memory_space<vmem>>, vector<128x128xbf16>
      %c0_16 = arith.constant 0 : index
      %c0_17 = arith.constant 0 : index
      %17 = vector.load %arg6[%c0_16, %c0_17] : memref<128x128xbf16, #tpu.memory_space<vmem>>, vector<128x128xbf16>
      %cst_18 = arith.constant dense<0.000000e+00> : vector<128x128xf32>
      %18 = tpu.matmul %16, %17, %cst_18 {dimension_numbers = #tpu.dot_dimension_numbers<[1], [0], [0], [1], [0, 0, 1, 1], [], []>} : vector<128x128xbf16>, vector<128x128xbf16>, vector<128x128xf32> -> vector<128x128xf32>
      %19 = arith.truncf %15 : vector<128x128xf32> to vector<128x128xbf16>
      %c0_19 = arith.constant 0 : index
      %c0_20 = arith.constant 0 : index
      %20 = vector.load %arg7[%c0_19, %c0_20] : memref<128x128xbf16, #tpu.memory_space<vmem>>, vector<128x128xbf16>
      %cst_21 = arith.constant dense<0.000000e+00> : vector<128x128xf32>
      %21 = tpu.matmul %19, %20, %cst_21 {dimension_numbers = #tpu.dot_dimension_numbers<[1], [0], [0], [1], [0, 0, 1, 1], [], []>} : vector<128x128xbf16>, vector<128x128xbf16>, vector<128x128xf32> -> vector<128x128xf32>
      %22 = arith.addf %18, %21 : vector<128x128xf32>
      %c0_22 = arith.constant 0 : index
      %c0_23 = arith.constant 0 : index
      %23 = vector.load %arg8[%c0_22, %c0_23] : memref<1x128xf32, #tpu.memory_space<vmem>>, vector<1x128xf32>
      %24 = vector.broadcast %23 : vector<1x128xf32> to vector<128x128xf32>
      %25 = arith.addf %22, %24 : vector<128x128xf32>
      %cst_24 = arith.constant 0.000000e+00 : f32
      %26 = vector.broadcast %cst_24 : f32 to vector<128x128xf32>
      %27 = arith.maximumf %25, %26 : vector<128x128xf32>
      %28 = arith.truncf %27 : vector<128x128xf32> to vector<128x128xbf16>
      %c0_25 = arith.constant 0 : index
      %c0_26 = arith.constant 0 : index
      %29 = vector.load %arg9[%c0_25, %c0_26] : memref<128x128xbf16, #tpu.memory_space<vmem>>, vector<128x128xbf16>
      tpu.vector_store %arg9[%c0_25, %c0_26], %28 {strides = array<i32>} : memref<128x128xbf16, #tpu.memory_space<vmem>>, vector<128x128xbf16>,
    } else {
    }
    return
  }
  func.func @transform_0(%arg0: i32, %arg1: i32) -> (i32, i32) {
    %c0_i32 = arith.constant 0 : i32
    return %arg0, %arg1 : i32, i32
  }
  func.func @transform_1(%arg0: i32, %arg1: i32) -> (i32, i32) {
    %c0_i32 = arith.constant 0 : i32
    %c0_i32_0 = arith.constant 0 : i32
    return %arg1, %c0_i32 : i32, i32
  }
  func.func @transform_2(%arg0: i32, %arg1: i32) -> (i32, i32) {
    %c0_i32 = arith.constant 0 : i32
    %c0_i32_0 = arith.constant 0 : i32
    return %arg0, %c0_i32 : i32, i32
  }
  func.func @transform_3(%arg0: i32, %arg1: i32) -> (i32, i32) {
    %c0_i32 = arith.constant 0 : i32
    %c0_i32_0 = arith.constant 0 : i32
    return %arg0, %c0_i32 : i32, i32
  }
  func.func @transform_4(%arg0: i32, %arg1: i32) -> (i32, i32) {
    %c0_i32 = arith.constant 0 : i32
    %c0_i32_0 = arith.constant 0 : i32
    %c0_i32_1 = arith.constant 0 : i32
    return %c0_i32, %c0_i32_0 : i32, i32
  }
  func.func @transform_5(%arg0: i32, %arg1: i32) -> (i32, i32) {
    %c0_i32 = arith.constant 0 : i32
    %c0_i32_0 = arith.constant 0 : i32
    %c0_i32_1 = arith.constant 0 : i32
    return %c0_i32, %c0_i32_0 : i32, i32
  }
  func.func @transform_6(%arg0: i32, %arg1: i32) -> (i32, i32) {
    %c0_i32 = arith.constant 0 : i32
    %c0_i32_0 = arith.constant 0 : i32
    %c0_i32_1 = arith.constant 0 : i32
    return %c0_i32, %c0_i32_0 : i32, i32
  }
  func.func @transform_7(%arg0: i32, %arg1: i32) -> (i32, i32) {
    %c0_i32 = arith.constant 0 : i32
    %c0_i32_0 = arith.constant 0 : i32
    return %arg0, %c0_i32 : i32, i32
  }
}

</mosaic_0001>

<llo_original>
// kernel: tpu_custom_call.1
$region0: #{tpu_custom_call.1}
  #allocation0 [shape = 'u32[]', space=smem, size = 0x4, offset = 0x4, fixed_abs, tag = 'smem constant byte address 0x4 - core index']
  #allocation1 [shape = 'u32[144,128]{1,0:T(1,128)}', space=vmem, size = 0x12000, scoped, tag = 'internal scratch']
  #allocation2 [shape = 'f32[128,128]{1,0:T(8,128)}', space=vmem, size = 0x10000, scoped, tag = 'scratch operand']
  %s0 = inlined_call_operand.vmem [shape: bf16[128,128], index: 0, kind: input, shape index: {}]
  %s1 = inlined_call_operand.vmem [shape: bf16[128,128], index: 1, kind: input, shape index: {}]
  %s2 = inlined_call_operand.hbm [shape: bf16[128,128], index: 2, kind: input, shape index: {}]
  %s3 = inlined_call_operand.vmem [shape: f32[128,1], index: 3, kind: input, shape index: {}]
  %s4 = inlined_call_operand.hbm [shape: bf16[128,128], index: 4, kind: input, shape index: {}]
  %s5 = inlined_call_operand.hbm [shape: bf16[128,128], index: 5, kind: input, shape index: {}]
  %s6 = inlined_call_operand.vmem [shape: f32[1,128], index: 6, kind: input, shape index: {}]
  %s7 = inlined_call_operand.hbm [shape: bf16[128,128], index: 7, kind: output, shape index: {}]
  %s8 = sld [smem:[#allocation0]]
  $region58: #{tpu_custom_call.1} parent=0
    _
  %s10 = ssub.s32 1, %s8
  %s11 = scalar_select 0, %s10, %s8
  $region1: #{tpu_custom_call.1} parent=0
    #allocation3 [shape = 'u8[32768]{0}', space=vmem, size = 0x8000, scoped, tag = 'input window, operand 2, single buffered']
    #allocation4 [shape = 's32[1]{0}', space=sflag, size = 0x4, scoped, tag = 'scoped memory for tpu_custom_call.1']
    #allocation5 [shape = 's32[1]{0}', space=sflag, size = 0x4, scoped, tag = 'scoped memory for tpu_custom_call.1']
    #allocation6 [shape = 'u8[32768]{0}', space=vmem, size = 0x8000, scoped, tag = 'input window, operand 4, single buffered']
    #allocation7 [shape = 's32[1]{0}', space=sflag, size = 0x4, scoped, tag = 'scoped memory for tpu_custom_call.1']
    #allocation8 [shape = 'u8[32768]{0}', space=vmem, size = 0x8000, scoped, tag = 'input window, operand 5, single buffered']
    #allocation9 [shape = 'u8[32768]{0}', space=vmem, size = 0x8000, scoped, tag = 'output window, operand 0, single buffered']
    %12 = vsyncpa [#allocation4], 0
    %13 = vsyncpa [#allocation7], 0
    %14 = vsyncpa [#allocation5], 0
    // Predicated region
    $region2: #{tpu_custom_call.1} parent=1 // pred_check
      _
    $region3: #{tpu_custom_call.1} parent=1 // pred_check_branch
      %16 = sbr.rel (0) target = $region5
    $region4: #{tpu_custom_call.1} parent=1 // pred_region
      _
    $region5: #{tpu_custom_call.1} parent=1 // pred_fallthru
      _
    // Predicated region
    $region6: #{tpu_custom_call.1} parent=1 // pred_check
      _
    $region7: #{tpu_custom_call.1} parent=1 // pred_check_branch
      %18 = sbr.rel (0) target = $region9
    $region8: #{tpu_custom_call.1} parent=1 // pred_region
      _
    $region9: #{tpu_custom_call.1} parent=1 // pred_fallthru
      _
    // Predicated region
    $region10: #{tpu_custom_call.1} parent=1 // pred_check
      _
    $region11: #{tpu_custom_call.1} parent=1 // pred_check_branch
      %20 = sbr.rel (0) target = $region13
    $region12: #{tpu_custom_call.1} parent=1 // pred_region
      %s22 = ssub.s32 1024, 1024
      %23 = vsyncadd [#allocation4], %s22
      %s24 = sshll.u32 [#allocation3], 4
      %s25 = int_to_ptr.vmem [resolvable:$true] %s24
      %30 = dma.hbm_to_vmem [thread:$0]  %s2, 1024, %s25, [#allocation4], 64, 64, 4
    $region13: #{tpu_custom_call.1} parent=1 // pred_fallthru
      _
    // Predicated region
    $region14: #{tpu_custom_call.1} parent=1 // pred_check
      _
    $region15: #{tpu_custom_call.1} parent=1 // pred_check_branch
      %32 = sbr.rel (0) target = $region17
    $region16: #{tpu_custom_call.1} parent=1 // pred_region
      _
    $region17: #{tpu_custom_call.1} parent=1 // pred_fallthru
      _
    // Predicated region
    $region18: #{tpu_custom_call.1} parent=1 // pred_check
      _
    $region19: #{tpu_custom_call.1} parent=1 // pred_check_branch
      %34 = sbr.rel (0) target = $region21
    $region20: #{tpu_custom_call.1} parent=1 // pred_region
      %s36 = ssub.s32 1024, 1024
      %37 = vsyncadd [#allocation7], %s36
      %s38 = sshll.u32 [#allocation6], 4
      %s39 = int_to_ptr.vmem [resolvable:$true] %s38
      %44 = dma.hbm_to_vmem [thread:$0]  %s4, 1024, %s39, [#allocation7], 64, 64, 4
    $region21: #{tpu_custom_call.1} parent=1 // pred_fallthru
      _
    // Predicated region
    $region22: #{tpu_custom_call.1} parent=1 // pred_check
      _
    $region23: #{tpu_custom_call.1} parent=1 // pred_check_branch
      %46 = sbr.rel (0) target = $region25
    $region24: #{tpu_custom_call.1} parent=1 // pred_region
      %s48 = ssub.s32 1024, 1024
      %49 = vsyncadd [#allocation7], %s48
      %s50 = sshll.u32 [#allocation8], 4
      %s51 = int_to_ptr.vmem [resolvable:$true] %s50
      %56 = dma.hbm_to_vmem [thread:$0]  %s5, 1024, %s51, [#allocation7], 64, 64, 4
    $region25: #{tpu_custom_call.1} parent=1 // pred_fallthru
      _
    // Predicated region
    $region26: #{tpu_custom_call.1} parent=1 // pred_check
      _
    $region27: #{tpu_custom_call.1} parent=1 // pred_check_branch
      %58 = sbr.rel (0) target = $region29
    $region28: #{tpu_custom_call.1} parent=1 // pred_region
      _
    $region29: #{tpu_custom_call.1} parent=1 // pred_fallthru
      _
    // Predicated region
    $region30: #{tpu_custom_call.1} parent=1 // pred_check
      _
    $region31: #{tpu_custom_call.1} parent=1 // pred_check_branch
      %60 = sbr.rel (0) target = $region33
    $region32: #{tpu_custom_call.1} parent=1 // pred_region
      %61 = dma.done [#allocation4], 1024
    $region33: #{tpu_custom_call.1} parent=1 // pred_fallthru
      _
    // Predicated region
    $region34: #{tpu_custom_call.1} parent=1 // pred_check
      _
    $region35: #{tpu_custom_call.1} parent=1 // pred_check_branch
      %63 = sbr.rel (0) target = $region37
    $region36: #{tpu_custom_call.1} parent=1 // pred_region
      %64 = dma.done [#allocation7], 1024
    $region37: #{tpu_custom_call.1} parent=1 // pred_fallthru
      _
    // Predicated region
    $region38: #{tpu_custom_call.1} parent=1 // pred_check
      _
    $region39: #{tpu_custom_call.1} parent=1 // pred_check_branch
      %66 = sbr.rel (0) target = $region41
    $region40: #{tpu_custom_call.1} parent=1 // pred_region
      %67 = dma.done [#allocation7], 1024
    $region41: #{tpu_custom_call.1} parent=1 // pred_fallthru
      _
    %p69 = scmp.eq.s32.totalorder 0, 0
    // Predicated region
    $region42: #{tpu_custom_call.1} parent=1 // pred_check
      %p70 = pneg %p69
    $region43: #{tpu_custom_call.1} parent=1 // pred_check_branch
      %72 = sbr.rel (%p70) target = $region45
    $region44: #{tpu_custom_call.1} parent=1 // pred_region
      %73 = vst [vmem:[#allocation2] sm:$0xff] 0.0
      %74 = vst [vmem:[#allocation2 + $0x8] sm:$0xff] 0.0
      %75 = vst [vmem:[#allocation2 + $0x10] sm:$0xff] 0.0
      %76 = vst [vmem:[#allocation2 + $0x18] sm:$0xff] 0.0
      %77 = vst [vmem:[#allocation2 + $0x20] sm:$0xff] 0.0
      %78 = vst [vmem:[#allocation2 + $0x28] sm:$0xff] 0.0
      %79 = vst [vmem:[#allocation2 + $0x30] sm:$0xff] 0.0
      %80 = vst [vmem:[#allocation2 + $0x38] sm:$0xff] 0.0
      %81 = vst [vmem:[#allocation2 + $0x40] sm:$0xff] 0.0
      %82 = vst [vmem:[#allocation2 + $0x48] sm:$0xff] 0.0
      %83 = vst [vmem:[#allocation2 + $0x50] sm:$0xff] 0.0
      %84 = vst [vmem:[#allocation2 + $0x58] sm:$0xff] 0.0
      %85 = vst [vmem:[#allocation2 + $0x60] sm:$0xff] 0.0
      %86 = vst [vmem:[#allocation2 + $0x68] sm:$0xff] 0.0
      %87 = vst [vmem:[#allocation2 + $0x70] sm:$0xff] 0.0
      %88 = vst [vmem:[#allocation2 + $0x78] sm:$0xff] 0.0
    $region45: #{tpu_custom_call.1} parent=1 // pred_fallthru
      _
    %v89 = vld [vmem:[#allocation2] sm:$0xff]
    %v90 = vld [vmem:[#allocation2 + $0x8] sm:$0xff]
    %v91 = vld [vmem:[#allocation2 + $0x10] sm:$0xff]
    %v92 = vld [vmem:[#allocation2 + $0x18] sm:$0xff]
    %v93 = vld [vmem:[#allocation2 + $0x20] sm:$0xff]
    %v94 = vld [vmem:[#allocation2 + $0x28] sm:$0xff]
    %v95 = vld [vmem:[#allocation2 + $0x30] sm:$0xff]
    %v96 = vld [vmem:[#allocation2 + $0x38] sm:$0xff]
    %v97 = vld [vmem:[#allocation2 + $0x40] sm:$0xff]
    %v98 = vld [vmem:[#allocation2 + $0x48] sm:$0xff]
    %v99 = vld [vmem:[#allocation2 + $0x50] sm:$0xff]
    %v100 = vld [vmem:[#allocation2 + $0x58] sm:$0xff]
    %v101 = vld [vmem:[#allocation2 + $0x60] sm:$0xff]
    %v102 = vld [vmem:[#allocation2 + $0x68] sm:$0xff]
    %v103 = vld [vmem:[#allocation2 + $0x70] sm:$0xff]
    %v104 = vld [vmem:[#allocation2 + $0x78] sm:$0xff]
    %v105 = vld [vmem:[%s0] sm:$0xf]
    %v106 = vld [vmem:[%s0 + $0x4] sm:$0xf]
    %v107 = vld [vmem:[%s0 + $0x8] sm:$0xf]
    %v108 = vld [vmem:[%s0 + $0xc] sm:$0xf]
    %v109 = vld [vmem:[%s0 + $0x10] sm:$0xf]
    %v110 = vld [vmem:[%s0 + $0x14] sm:$0xf]
    %v111 = vld [vmem:[%s0 + $0x18] sm:$0xf]
    %v112 = vld [vmem:[%s0 + $0x1c] sm:$0xf]
    %v113 = vld [vmem:[%s0 + $0x20] sm:$0xf]
    %v114 = vld [vmem:[%s0 + $0x24] sm:$0xf]
    %v115 = vld [vmem:[%s0 + $0x28] sm:$0xf]
    %v116 = vld [vmem:[%s0 + $0x2c] sm:$0xf]
    %v117 = vld [vmem:[%s0 + $0x30] sm:$0xf]
    %v118 = vld [vmem:[%s0 + $0x34] sm:$0xf]
    %v119 = vld [vmem:[%s0 + $0x38] sm:$0xf]
    %v120 = vld [vmem:[%s0 + $0x3c] sm:$0xf]
    %v121 = vld [vmem:[%s1] sm:$0xf]
    %v122 = vld [vmem:[%s1 + $0x4] sm:$0xf]
    %v123 = vld [vmem:[%s1 + $0x8] sm:$0xf]
    %v124 = vld [vmem:[%s1 + $0xc] sm:$0xf]
    %v125 = vld [vmem:[%s1 + $0x10] sm:$0xf]
    %v126 = vld [vmem:[%s1 + $0x14] sm:$0xf]
    %v127 = vld [vmem:[%s1 + $0x18] sm:$0xf]
    %v128 = vld [vmem:[%s1 + $0x1c] sm:$0xf]
    %v129 = vld [vmem:[%s1 + $0x20] sm:$0xf]
    %v130 = vld [vmem:[%s1 + $0x24] sm:$0xf]
    %v131 = vld [vmem:[%s1 + $0x28] sm:$0xf]
    %v132 = vld [vmem:[%s1 + $0x2c] sm:$0xf]
    %v133 = vld [vmem:[%s1 + $0x30] sm:$0xf]
    %v134 = vld [vmem:[%s1 + $0x34] sm:$0xf]
    %v135 = vld [vmem:[%s1 + $0x38] sm:$0xf]
    %v136 = vld [vmem:[%s1 + $0x3c] sm:$0xf]
    %v153 = vunpack.c.l.b16 %v105
    %v154 = vunpack.c.l.b16 %v106
    %v155 = vunpack.c.l.b16 %v107
    %v156 = vunpack.c.l.b16 %v108
    %v157 = vunpack.c.l.b16 %v109
    %v158 = vunpack.c.l.b16 %v110
    %v159 = vunpack.c.l.b16 %v111
    %v160 = vunpack.c.l.b16 %v112
    %v161 = vunpack.c.l.b16 %v113
    %v162 = vunpack.c.l.b16 %v114
    %v163 = vunpack.c.l.b16 %v115
    %v164 = vunpack.c.l.b16 %v116
    %v165 = vunpack.c.l.b16 %v117
    %v166 = vunpack.c.l.b16 %v118
    %v167 = vunpack.c.l.b16 %v119
    %v168 = vunpack.c.l.b16 %v120
    %v169 = vpack.c.b16 %v154, %v153
    %v170 = vpack.c.b16 %v156, %v155
    %v171 = vpack.c.b16 %v158, %v157
    %v172 = vpack.c.b16 %v160, %v159
    %v173 = vpack.c.b16 %v162, %v161
    %v174 = vpack.c.b16 %v164, %v163
    %v175 = vpack.c.b16 %v166, %v165
    %v176 = vpack.c.b16 %v168, %v167
    %v201 = vunpack.c.l.b16 %v121
    %v202 = vunpack.c.l.b16 %v122
    %v203 = vunpack.c.l.b16 %v123
    %v204 = vunpack.c.l.b16 %v124
    %v205 = vunpack.c.l.b16 %v125
    %v206 = vunpack.c.l.b16 %v126
    %v207 = vunpack.c.l.b16 %v127
    %v208 = vunpack.c.l.b16 %v128
    %v209 = vunpack.c.l.b16 %v129
    %v210 = vunpack.c.l.b16 %v130
    %v211 = vunpack.c.l.b16 %v131
    %v212 = vunpack.c.l.b16 %v132
    %v213 = vunpack.c.l.b16 %v133
    %v214 = vunpack.c.l.b16 %v134
    %v215 = vunpack.c.l.b16 %v135
    %v216 = vunpack.c.l.b16 %v136
    %v217 = vpack.c.b16 %v202, %v201
    %v218 = vpack.c.b16 %v204, %v203
    %v219 = vpack.c.b16 %v206, %v205
    %v220 = vpack.c.b16 %v208, %v207
    %v221 = vpack.c.b16 %v210, %v209
    %v222 = vpack.c.b16 %v212, %v211
    %v223 = vpack.c.b16 %v214, %v213
    %v224 = vpack.c.b16 %v216, %v215
    %233 = vmatprep.subr.bf16.mxu0 0
    %234 = vmatpush1.bf16.msra.mxu0 %v224
    %235 = vmatprep.subr.bf16.mxu0 0
    %236 = vmatpush1.bf16.msra.mxu0 %v223
    %237 = vmatprep.subr.bf16.mxu0 0
    %238 = vmatpush1.bf16.msra.mxu0 %v222
    %239 = vmatprep.subr.bf16.mxu0 0
    %240 = vmatpush1.bf16.msra.mxu0 %v221
    %241 = vmatprep.subr.bf16.mxu0 0
    %242 = vmatpush1.bf16.msra.mxu0 %v220
    %243 = vmatprep.subr.bf16.mxu0 0
    %244 = vmatpush1.bf16.msra.mxu0 %v219
    %245 = vmatprep.subr.bf16.mxu0 0
    %246 = vmatpush1.bf16.msra.mxu0 %v218
    %247 = vmatprep.subr.bf16.mxu0 0
    %248 = vmatpush1.bf16.msra.mxu0 %v217
    %249 = vmatprep.subr.bf16.mxu0 0
    %250 = vmatpush2.bf16.msra.mxu0 0
    %251 = vmatprep.subr.bf16.mxu0 0
    %252 = vmatpush2.bf16.msra.mxu0 0
    %253 = vmatprep.subr.bf16.mxu0 0
    %254 = vmatpush2.bf16.msra.mxu0 0
    %255 = vmatprep.subr.bf16.mxu0 0
    %256 = vmatpush2.bf16.msra.mxu0 0
    %257 = vmatprep.subr.bf16.mxu0 0
    %258 = vmatpush2.bf16.msra.mxu0 0
    %259 = vmatprep.subr.bf16.mxu0 0
    %260 = vmatpush2.bf16.msra.mxu0 0
    %261 = vmatprep.subr.bf16.mxu0 0
    %262 = vmatpush2.bf16.msra.mxu0 0
    %263 = vmatprep.subr.bf16.mxu0 0
    %264 = vmatpush2.bf16.msra.mxu0 0
    %265 = vmatprep.mubr.bf16.mxu0 0
    %266 = vmatmul.mubr.bf16.gmra.mxu0 %v169
    %v267 = vpop.f32.mrf.mxu0
    %v268 = vadd.f32 0.0, %v267
    %v269 = vpop.f32.mrf.mxu0
    %v270 = vpop.f32.mrf.mxu0
    %v271 = vadd.f32 0.0, %v270
    %v272 = vpop.f32.mrf.mxu0
    %273 = vmatprep.mubr.bf16.mxu0 0
    %274 = vmatmul.mubr.bf16.gmra.mxu0 %v170
    %v275 = vpop.f32.mrf.mxu0
    %v276 = vadd.f32 0.0, %v275
    %v277 = vpop.f32.mrf.mxu0
    %v278 = vpop.f32.mrf.mxu0
    %v279 = vadd.f32 0.0, %v278
    %v280 = vpop.f32.mrf.mxu0
    %281 = vmatprep.mubr.bf16.mxu0 0
    %282 = vmatmul.mubr.bf16.gmra.mxu0 %v171
    %v283 = vpop.f32.mrf.mxu0
    %v284 = vadd.f32 0.0, %v283
    %v285 = vpop.f32.mrf.mxu0
    %v286 = vpop.f32.mrf.mxu0
    %v287 = vadd.f32 0.0, %v286
    %v288 = vpop.f32.mrf.mxu0
    %289 = vmatprep.mubr.bf16.mxu0 0
    %290 = vmatmul.mubr.bf16.gmra.mxu0 %v172
    %v291 = vpop.f32.mrf.mxu0
    %v292 = vadd.f32 0.0, %v291
    %v293 = vpop.f32.mrf.mxu0
    %v294 = vpop.f32.mrf.mxu0
    %v295 = vadd.f32 0.0, %v294
    %v296 = vpop.f32.mrf.mxu0
    %297 = vmatprep.mubr.bf16.mxu0 0
    %298 = vmatmul.mubr.bf16.gmra.mxu0 %v173
    %v299 = vpop.f32.mrf.mxu0
    %v300 = vadd.f32 0.0, %v299
    %v301 = vpop.f32.mrf.mxu0
    %v302 = vpop.f32.mrf.mxu0
    %v303 = vadd.f32 0.0, %v302
    %v304 = vpop.f32.mrf.mxu0
    %305 = vmatprep.mubr.bf16.mxu0 0
    %306 = vmatmul.mubr.bf16.gmra.mxu0 %v174
    %v307 = vpop.f32.mrf.mxu0
    %v308 = vadd.f32 0.0, %v307
    %v309 = vpop.f32.mrf.mxu0
    %v310 = vpop.f32.mrf.mxu0
    %v311 = vadd.f32 0.0, %v310
    %v312 = vpop.f32.mrf.mxu0
    %313 = vmatprep.mubr.bf16.mxu0 0
    %314 = vmatmul.mubr.bf16.gmra.mxu0 %v175
    %v315 = vpop.f32.mrf.mxu0
    %v316 = vadd.f32 0.0, %v315
    %v317 = vpop.f32.mrf.mxu0
    %v318 = vpop.f32.mrf.mxu0
    %v319 = vadd.f32 0.0, %v318
    %v320 = vpop.f32.mrf.mxu0
    %321 = vmatprep.mubr.bf16.mxu0 0
    %322 = vmatmul.mubr.bf16.gmra.mxu0 %v176
    %v323 = vpop.f32.mrf.mxu0
    %v324 = vadd.f32 0.0, %v323
    %v325 = vpop.f32.mrf.mxu0
    %v326 = vpop.f32.mrf.mxu0
    %v327 = vadd.f32 0.0, %v326
    %v328 = vpop.f32.mrf.mxu0
    %329 = vdwg.mxu0
    %v330 = vadd.f32 %v89, %v268
    %v331 = vadd.f32 %v90, %v271
    %v332 = vadd.f32 %v91, %v276
    %v333 = vadd.f32 %v92, %v279
    %v334 = vadd.f32 %v93, %v284
    %v335 = vadd.f32 %v94, %v287
    %v336 = vadd.f32 %v95, %v292
    %v337 = vadd.f32 %v96, %v295
    %v338 = vadd.f32 %v97, %v300
    %v339 = vadd.f32 %v98, %v303
    %v340 = vadd.f32 %v99, %v308
    %v341 = vadd.f32 %v100, %v311
    %v342 = vadd.f32 %v101, %v316
    %v343 = vadd.f32 %v102, %v319
    %v344 = vadd.f32 %v103, %v324
    %v345 = vadd.f32 %v104, %v327
    %346 = vst [vmem:[#allocation2] sm:$0xff] %v330
    %347 = vst [vmem:[#allocation2 + $0x8] sm:$0xff] %v331
    %348 = vst [vmem:[#allocation2 + $0x10] sm:$0xff] %v332
    %349 = vst [vmem:[#allocation2 + $0x18] sm:$0xff] %v333
    %350 = vst [vmem:[#allocation2 + $0x20] sm:$0xff] %v334
    %351 = vst [vmem:[#allocation2 + $0x28] sm:$0xff] %v335
    %352 = vst [vmem:[#allocation2 + $0x30] sm:$0xff] %v336
    %353 = vst [vmem:[#allocation2 + $0x38] sm:$0xff] %v337
    %354 = vst [vmem:[#allocation2 + $0x40] sm:$0xff] %v338
    %355 = vst [vmem:[#allocation2 + $0x48] sm:$0xff] %v339
    %356 = vst [vmem:[#allocation2 + $0x50] sm:$0xff] %v340
    %357 = vst [vmem:[#allocation2 + $0x58] sm:$0xff] %v341
    %358 = vst [vmem:[#allocation2 + $0x60] sm:$0xff] %v342
    %359 = vst [vmem:[#allocation2 + $0x68] sm:$0xff] %v343
    %360 = vst [vmem:[#allocation2 + $0x70] sm:$0xff] %v344
    %361 = vst [vmem:[#allocation2 + $0x78] sm:$0xff] %v345
    // Predicated region
    $region46: #{tpu_custom_call.1} parent=1 // pred_check
      %p362 = pneg %p69
    $region47: #{tpu_custom_call.1} parent=1 // pred_check_branch
      %364 = sbr.rel (%p362) target = $region49
    $region48: #{tpu_custom_call.1} parent=1 // pred_region
      %v365 = vld [vmem:[#allocation2] sm:$0xff]
      %v366 = vld [vmem:[#allocation2 + $0x8] sm:$0xff]
      %v367 = vld [vmem:[#allocation2 + $0x10] sm:$0xff]
      %v368 = vld [vmem:[#allocation2 + $0x18] sm:$0xff]
      %v369 = vld [vmem:[#allocation2 + $0x20] sm:$0xff]
      %v370 = vld [vmem:[#allocation2 + $0x28] sm:$0xff]
      %v371 = vld [vmem:[#allocation2 + $0x30] sm:$0xff]
      %v372 = vld [vmem:[#allocation2 + $0x38] sm:$0xff]
      %v373 = vld [vmem:[#allocation2 + $0x40] sm:$0xff]
      %v374 = vld [vmem:[#allocation2 + $0x48] sm:$0xff]
      %v375 = vld [vmem:[#allocation2 + $0x50] sm:$0xff]
      %v376 = vld [vmem:[#allocation2 + $0x58] sm:$0xff]
      %v377 = vld [vmem:[#allocation2 + $0x60] sm:$0xff]
      %v378 = vld [vmem:[#allocation2 + $0x68] sm:$0xff]
      %v379 = vld [vmem:[#allocation2 + $0x70] sm:$0xff]
      %v380 = vld [vmem:[#allocation2 + $0x78] sm:$0xff]
      %v381 = vld [vmem:[%s3] sm:$0xff]
      %v382 = vld [vmem:[%s3 + $0x8] sm:$0xff]
      %v383 = vld [vmem:[%s3 + $0x10] sm:$0xff]
      %v384 = vld [vmem:[%s3 + $0x18] sm:$0xff]
      %v385 = vld [vmem:[%s3 + $0x20] sm:$0xff]
      %v386 = vld [vmem:[%s3 + $0x28] sm:$0xff]
      %v387 = vld [vmem:[%s3 + $0x30] sm:$0xff]
      %v388 = vld [vmem:[%s3 + $0x38] sm:$0xff]
      %v389 = vld [vmem:[%s3 + $0x40] sm:$0xff]
      %v390 = vld [vmem:[%s3 + $0x48] sm:$0xff]
      %v391 = vld [vmem:[%s3 + $0x50] sm:$0xff]
      %v392 = vld [vmem:[%s3 + $0x58] sm:$0xff]
      %v393 = vld [vmem:[%s3 + $0x60] sm:$0xff]
      %v394 = vld [vmem:[%s3 + $0x68] sm:$0xff]
      %v395 = vld [vmem:[%s3 + $0x70] sm:$0xff]
      %v396 = vld [vmem:[%s3 + $0x78] sm:$0xff]
      %398 = vset.pattern.permute.xlu0 0
      %399 = vperm.xlu0 %398, %v381
      %v400 = vpop.permute.xlu0 %399
      %403 = vset.pattern.permute.xlu0 0
      %404 = vperm.xlu0 %403, %v382
      %v405 = vpop.permute.xlu0 %404
      %408 = vset.pattern.permute.xlu0 0
      %409 = vperm.xlu0 %408, %v383
      %v410 = vpop.permute.xlu0 %409
      %413 = vset.pattern.permute.xlu0 0
      %414 = vperm.xlu0 %413, %v384
      %v415 = vpop.permute.xlu0 %414
      %418 = vset.pattern.permute.xlu0 0
      %419 = vperm.xlu0 %418, %v385
      %v420 = vpop.permute.xlu0 %419
      %423 = vset.pattern.permute.xlu0 0
      %424 = vperm.xlu0 %423, %v386
      %v425 = vpop.permute.xlu0 %424
      %428 = vset.pattern.permute.xlu0 0
      %429 = vperm.xlu0 %428, %v387
      %v430 = vpop.permute.xlu0 %429
      %433 = vset.pattern.permute.xlu0 0
      %434 = vperm.xlu0 %433, %v388
      %v435 = vpop.permute.xlu0 %434
      %438 = vset.pattern.permute.xlu0 0
      %439 = vperm.xlu0 %438, %v389
      %v440 = vpop.permute.xlu0 %439
      %443 = vset.pattern.permute.xlu0 0
      %444 = vperm.xlu0 %443, %v390
      %v445 = vpop.permute.xlu0 %444
      %448 = vset.pattern.permute.xlu0 0
      %449 = vperm.xlu0 %448, %v391
      %v450 = vpop.permute.xlu0 %449
      %453 = vset.pattern.permute.xlu0 0
      %454 = vperm.xlu0 %453, %v392
      %v455 = vpop.permute.xlu0 %454
      %458 = vset.pattern.permute.xlu0 0
      %459 = vperm.xlu0 %458, %v393
      %v460 = vpop.permute.xlu0 %459
      %463 = vset.pattern.permute.xlu0 0
      %464 = vperm.xlu0 %463, %v394
      %v465 = vpop.permute.xlu0 %464
      %468 = vset.pattern.permute.xlu0 0
      %469 = vperm.xlu0 %468, %v395
      %v470 = vpop.permute.xlu0 %469
      %473 = vset.pattern.permute.xlu0 0
      %474 = vperm.xlu0 %473, %v396
      %v475 = vpop.permute.xlu0 %474
      %v477 = vmul.f32 %v365, %v400
      %v478 = vmul.f32 %v366, %v405
      %v479 = vmul.f32 %v367, %v410
      %v480 = vmul.f32 %v368, %v415
      %v481 = vmul.f32 %v369, %v420
      %v482 = vmul.f32 %v370, %v425
      %v483 = vmul.f32 %v371, %v430
      %v484 = vmul.f32 %v372, %v435
      %v485 = vmul.f32 %v373, %v440
      %v486 = vmul.f32 %v374, %v445
      %v487 = vmul.f32 %v375, %v450
      %v488 = vmul.f32 %v376, %v455
      %v489 = vmul.f32 %v377, %v460
      %v490 = vmul.f32 %v378, %v465
      %v491 = vmul.f32 %v379, %v470
      %v492 = vmul.f32 %v380, %v475
      %v493 = vld [vmem:[#allocation3] sm:$0xf]
      %v494 = vld [vmem:[#allocation3 + $0x4] sm:$0xf]
      %v495 = vld [vmem:[#allocation3 + $0x8] sm:$0xf]
      %v496 = vld [vmem:[#allocation3 + $0xc] sm:$0xf]
      %v497 = vld [vmem:[#allocation3 + $0x10] sm:$0xf]
      %v498 = vld [vmem:[#allocation3 + $0x14] sm:$0xf]
      %v499 = vld [vmem:[#allocation3 + $0x18] sm:$0xf]
      %v500 = vld [vmem:[#allocation3 + $0x1c] sm:$0xf]
      %v501 = vld [vmem:[#allocation3 + $0x20] sm:$0xf]
      %v502 = vld [vmem:[#allocation3 + $0x24] sm:$0xf]
      %v503 = vld [vmem:[#allocation3 + $0x28] sm:$0xf]
      %v504 = vld [vmem:[#allocation3 + $0x2c] sm:$0xf]
      %v505 = vld [vmem:[#allocation3 + $0x30] sm:$0xf]
      %v506 = vld [vmem:[#allocation3 + $0x34] sm:$0xf]
      %v507 = vld [vmem:[#allocation3 + $0x38] sm:$0xf]
      %v508 = vld [vmem:[#allocation3 + $0x3c] sm:$0xf]
      %v509 = vld [vmem:[#allocation6] sm:$0xf]
      %v510 = vld [vmem:[#allocation6 + $0x4] sm:$0xf]
      %v511 = vld [vmem:[#allocation6 + $0x8] sm:$0xf]
      %v512 = vld [vmem:[#allocation6 + $0xc] sm:$0xf]
      %v513 = vld [vmem:[#allocation6 + $0x10] sm:$0xf]
      %v514 = vld [vmem:[#allocation6 + $0x14] sm:$0xf]
      %v515 = vld [vmem:[#allocation6 + $0x18] sm:$0xf]
      %v516 = vld [vmem:[#allocation6 + $0x1c] sm:$0xf]
      %v517 = vld [vmem:[#allocation6 + $0x20] sm:$0xf]
      %v518 = vld [vmem:[#allocation6 + $0x24] sm:$0xf]
      %v519 = vld [vmem:[#allocation6 + $0x28] sm:$0xf]
      %v520 = vld [vmem:[#allocation6 + $0x2c] sm:$0xf]
      %v521 = vld [vmem:[#allocation6 + $0x30] sm:$0xf]
      %v522 = vld [vmem:[#allocation6 + $0x34] sm:$0xf]
      %v523 = vld [vmem:[#allocation6 + $0x38] sm:$0xf]
      %v524 = vld [vmem:[#allocation6 + $0x3c] sm:$0xf]
      %v525 = vpack.c.bf16 %v478, %v477
      %v526 = vpack.c.bf16 %v480, %v479
      %v527 = vpack.c.bf16 %v482, %v481
      %v528 = vpack.c.bf16 %v484, %v483
      %v529 = vpack.c.bf16 %v486, %v485
      %v530 = vpack.c.bf16 %v488, %v487
      %v531 = vpack.c.bf16 %v490, %v489
      %v532 = vpack.c.bf16 %v492, %v491
      %v533 = vld [vmem:[#allocation8] sm:$0xf]
      %v534 = vld [vmem:[#allocation8 + $0x4] sm:$0xf]
      %v535 = vld [vmem:[#allocation8 + $0x8] sm:$0xf]
      %v536 = vld [vmem:[#allocation8 + $0xc] sm:$0xf]
      %v537 = vld [vmem:[#allocation8 + $0x10] sm:$0xf]
      %v538 = vld [vmem:[#allocation8 + $0x14] sm:$0xf]
      %v539 = vld [vmem:[#allocation8 + $0x18] sm:$0xf]
      %v540 = vld [vmem:[#allocation8 + $0x1c] sm:$0xf]
      %v541 = vld [vmem:[#allocation8 + $0x20] sm:$0xf]
      %v542 = vld [vmem:[#allocation8 + $0x24] sm:$0xf]
      %v543 = vld [vmem:[#allocation8 + $0x28] sm:$0xf]
      %v544 = vld [vmem:[#allocation8 + $0x2c] sm:$0xf]
      %v545 = vld [vmem:[#allocation8 + $0x30] sm:$0xf]
      %v546 = vld [vmem:[#allocation8 + $0x34] sm:$0xf]
      %v547 = vld [vmem:[#allocation8 + $0x38] sm:$0xf]
      %v548 = vld [vmem:[#allocation8 + $0x3c] sm:$0xf]
      %v565 = vunpack.c.l.b16 %v533
      %v566 = vunpack.c.l.b16 %v534
      %v567 = vunpack.c.l.b16 %v535
      %v568 = vunpack.c.l.b16 %v536
      %v569 = vunpack.c.l.b16 %v537
      %v570 = vunpack.c.l.b16 %v538
      %v571 = vunpack.c.l.b16 %v539
      %v572 = vunpack.c.l.b16 %v540
      %v573 = vunpack.c.l.b16 %v541
      %v574 = vunpack.c.l.b16 %v542
      %v575 = vunpack.c.l.b16 %v543
      %v576 = vunpack.c.l.b16 %v544
      %v577 = vunpack.c.l.b16 %v545
      %v578 = vunpack.c.l.b16 %v546
      %v579 = vunpack.c.l.b16 %v547
      %v580 = vunpack.c.l.b16 %v548
      %v581 = vpack.c.b16 %v566, %v565
      %v582 = vpack.c.b16 %v568, %v567
      %v583 = vpack.c.b16 %v570, %v569
      %v584 = vpack.c.b16 %v572, %v571
      %v585 = vpack.c.b16 %v574, %v573
      %v586 = vpack.c.b16 %v576, %v575
      %v587 = vpack.c.b16 %v578, %v577
      %v588 = vpack.c.b16 %v580, %v579
      %597 = vmatprep.subr.bf16.mxu0 0
      %598 = vmatpush1.bf16.msra.mxu0 %v588
      %599 = vmatprep.subr.bf16.mxu0 0
      %600 = vmatpush1.bf16.msra.mxu0 %v587
      %601 = vmatprep.subr.bf16.mxu0 0
      %602 = vmatpush1.bf16.msra.mxu0 %v586
      %603 = vmatprep.subr.bf16.mxu0 0
      %604 = vmatpush1.bf16.msra.mxu0 %v585
      %605 = vmatprep.subr.bf16.mxu0 0
      %606 = vmatpush1.bf16.msra.mxu0 %v584
      %607 = vmatprep.subr.bf16.mxu0 0
      %608 = vmatpush1.bf16.msra.mxu0 %v583
      %609 = vmatprep.subr.bf16.mxu0 0
      %610 = vmatpush1.bf16.msra.mxu0 %v582
      %611 = vmatprep.subr.bf16.mxu0 0
      %612 = vmatpush1.bf16.msra.mxu0 %v581
      %613 = vmatprep.subr.bf16.mxu0 0
      %614 = vmatpush2.bf16.msra.mxu0 0
      %615 = vmatprep.subr.bf16.mxu0 0
      %616 = vmatpush2.bf16.msra.mxu0 0
      %617 = vmatprep.subr.bf16.mxu0 0
      %618 = vmatpush2.bf16.msra.mxu0 0
      %619 = vmatprep.subr.bf16.mxu0 0
      %620 = vmatpush2.bf16.msra.mxu0 0
      %621 = vmatprep.subr.bf16.mxu0 0
      %622 = vmatpush2.bf16.msra.mxu0 0
      %623 = vmatprep.subr.bf16.mxu0 0
      %624 = vmatpush2.bf16.msra.mxu0 0
      %625 = vmatprep.subr.bf16.mxu0 0
      %626 = vmatpush2.bf16.msra.mxu0 0
      %627 = vmatprep.subr.bf16.mxu0 0
      %628 = vmatpush2.bf16.msra.mxu0 0
      %629 = vmatprep.mubr.bf16.mxu0 0
      %630 = vmatmul.mubr.bf16.gmra.mxu0 %v525
      %v631 = vpop.f32.mrf.mxu0
      %v632 = vadd.f32 0.0, %v631
      %v633 = vpop.f32.mrf.mxu0
      %v634 = vpop.f32.mrf.mxu0
      %v635 = vadd.f32 0.0, %v634
      %v636 = vpop.f32.mrf.mxu0
      %637 = vmatprep.mubr.bf16.mxu0 0
      %638 = vmatmul.mubr.bf16.gmra.mxu0 %v526
      %v639 = vpop.f32.mrf.mxu0
      %v640 = vadd.f32 0.0, %v639
      %v641 = vpop.f32.mrf.mxu0
      %v642 = vpop.f32.mrf.mxu0
      %v643 = vadd.f32 0.0, %v642
      %v644 = vpop.f32.mrf.mxu0
      %645 = vmatprep.mubr.bf16.mxu0 0
      %646 = vmatmul.mubr.bf16.gmra.mxu0 %v527
      %v647 = vpop.f32.mrf.mxu0
      %v648 = vadd.f32 0.0, %v647
      %v649 = vpop.f32.mrf.mxu0
      %v650 = vpop.f32.mrf.mxu0
      %v651 = vadd.f32 0.0, %v650
      %v652 = vpop.f32.mrf.mxu0
      %653 = vmatprep.mubr.bf16.mxu0 0
      %654 = vmatmul.mubr.bf16.gmra.mxu0 %v528
      %v655 = vpop.f32.mrf.mxu0
      %v656 = vadd.f32 0.0, %v655
      %v657 = vpop.f32.mrf.mxu0
      %v658 = vpop.f32.mrf.mxu0
      %v659 = vadd.f32 0.0, %v658
      %v660 = vpop.f32.mrf.mxu0
      %661 = vmatprep.mubr.bf16.mxu0 0
      %662 = vmatmul.mubr.bf16.gmra.mxu0 %v529
      %v663 = vpop.f32.mrf.mxu0
      %v664 = vadd.f32 0.0, %v663
      %v665 = vpop.f32.mrf.mxu0
      %v666 = vpop.f32.mrf.mxu0
      %v667 = vadd.f32 0.0, %v666
      %v668 = vpop.f32.mrf.mxu0
      %669 = vmatprep.mubr.bf16.mxu0 0
      %670 = vmatmul.mubr.bf16.gmra.mxu0 %v530
      %v671 = vpop.f32.mrf.mxu0
      %v672 = vadd.f32 0.0, %v671
      %v673 = vpop.f32.mrf.mxu0
      %v674 = vpop.f32.mrf.mxu0
      %v675 = vadd.f32 0.0, %v674
      %v676 = vpop.f32.mrf.mxu0
      %677 = vmatprep.mubr.bf16.mxu0 0
      %678 = vmatmul.mubr.bf16.gmra.mxu0 %v531
      %v679 = vpop.f32.mrf.mxu0
      %v680 = vadd.f32 0.0, %v679
      %v681 = vpop.f32.mrf.mxu0
      %v682 = vpop.f32.mrf.mxu0
      %v683 = vadd.f32 0.0, %v682
      %v684 = vpop.f32.mrf.mxu0
      %685 = vmatprep.mubr.bf16.mxu0 0
      %686 = vmatmul.mubr.bf16.gmra.mxu0 %v532
      %v687 = vpop.f32.mrf.mxu0
      %v688 = vadd.f32 0.0, %v687
      %v689 = vpop.f32.mrf.mxu0
      %v690 = vpop.f32.mrf.mxu0
      %v691 = vadd.f32 0.0, %v690
      %v692 = vpop.f32.mrf.mxu0
      %693 = vdwg.mxu0
      %v710 = vunpack.c.l.b16 %v493
      %v711 = vunpack.c.l.b16 %v494
      %v712 = vunpack.c.l.b16 %v495
      %v713 = vunpack.c.l.b16 %v496
      %v714 = vunpack.c.l.b16 %v497
      %v715 = vunpack.c.l.b16 %v498
      %v716 = vunpack.c.l.b16 %v499
      %v717 = vunpack.c.l.b16 %v500
      %v718 = vunpack.c.l.b16 %v501
      %v719 = vunpack.c.l.b16 %v502
      %v720 = vunpack.c.l.b16 %v503
      %v721 = vunpack.c.l.b16 %v504
      %v722 = vunpack.c.l.b16 %v505
      %v723 = vunpack.c.l.b16 %v506
      %v724 = vunpack.c.l.b16 %v507
      %v725 = vunpack.c.l.b16 %v508
      %v726 = vpack.c.b16 %v711, %v710
      %v727 = vpack.c.b16 %v713, %v712
      %v728 = vpack.c.b16 %v715, %v714
      %v729 = vpack.c.b16 %v717, %v716
      %v730 = vpack.c.b16 %v719, %v718
      %v731 = vpack.c.b16 %v721, %v720
      %v732 = vpack.c.b16 %v723, %v722
      %v733 = vpack.c.b16 %v725, %v724
      %v758 = vunpack.c.l.b16 %v509
      %v759 = vunpack.c.l.b16 %v510
      %v760 = vunpack.c.l.b16 %v511
      %v761 = vunpack.c.l.b16 %v512
      %v762 = vunpack.c.l.b16 %v513
      %v763 = vunpack.c.l.b16 %v514
      %v764 = vunpack.c.l.b16 %v515
      %v765 = vunpack.c.l.b16 %v516
      %v766 = vunpack.c.l.b16 %v517
      %v767 = vunpack.c.l.b16 %v518
      %v768 = vunpack.c.l.b16 %v519
      %v769 = vunpack.c.l.b16 %v520
      %v770 = vunpack.c.l.b16 %v521
      %v771 = vunpack.c.l.b16 %v522
      %v772 = vunpack.c.l.b16 %v523
      %v773 = vunpack.c.l.b16 %v524
      %v774 = vpack.c.b16 %v759, %v758
      %v775 = vpack.c.b16 %v761, %v760
      %v776 = vpack.c.b16 %v763, %v762
      %v777 = vpack.c.b16 %v765, %v764
      %v778 = vpack.c.b16 %v767, %v766
      %v779 = vpack.c.b16 %v769, %v768
      %v780 = vpack.c.b16 %v771, %v770
      %v781 = vpack.c.b16 %v773, %v772
      %790 = vmatprep.subr.bf16.mxu0 0
      %791 = vmatpush1.bf16.msra.mxu0 %v781
      %792 = vmatprep.subr.bf16.mxu0 0
      %793 = vmatpush1.bf16.msra.mxu0 %v780
      %794 = vmatprep.subr.bf16.mxu0 0
      %795 = vmatpush1.bf16.msra.mxu0 %v779
      %796 = vmatprep.subr.bf16.mxu0 0
      %797 = vmatpush1.bf16.msra.mxu0 %v778
      %798 = vmatprep.subr.bf16.mxu0 0
      %799 = vmatpush1.bf16.msra.mxu0 %v777
      %800 = vmatprep.subr.bf16.mxu0 0
      %801 = vmatpush1.bf16.msra.mxu0 %v776
      %802 = vmatprep.subr.bf16.mxu0 0
      %803 = vmatpush1.bf16.msra.mxu0 %v775
      %804 = vmatprep.subr.bf16.mxu0 0
      %805 = vmatpush1.bf16.msra.mxu0 %v774
      %806 = vmatprep.subr.bf16.mxu0 0
      %807 = vmatpush2.bf16.msra.mxu0 0
      %808 = vmatprep.subr.bf16.mxu0 0
      %809 = vmatpush2.bf16.msra.mxu0 0
      %810 = vmatprep.subr.bf16.mxu0 0
      %811 = vmatpush2.bf16.msra.mxu0 0
      %812 = vmatprep.subr.bf16.mxu0 0
      %813 = vmatpush2.bf16.msra.mxu0 0
      %814 = vmatprep.subr.bf16.mxu0 0
      %815 = vmatpush2.bf16.msra.mxu0 0
      %816 = vmatprep.subr.bf16.mxu0 0
      %817 = vmatpush2.bf16.msra.mxu0 0
      %818 = vmatprep.subr.bf16.mxu0 0
      %819 = vmatpush2.bf16.msra.mxu0 0
      %820 = vmatprep.subr.bf16.mxu0 0
      %821 = vmatpush2.bf16.msra.mxu0 0
      %822 = vmatprep.mubr.bf16.mxu0 0
      %823 = vmatmul.mubr.bf16.gmra.mxu0 %v726
      %v824 = vpop.f32.mrf.mxu0
      %v825 = vadd.f32 %v632, %v824
      %v826 = vpop.f32.mrf.mxu0
      %v827 = vpop.f32.mrf.mxu0
      %v828 = vadd.f32 %v635, %v827
      %v829 = vpop.f32.mrf.mxu0
      %830 = vmatprep.mubr.bf16.mxu0 0
      %831 = vmatmul.mubr.bf16.gmra.mxu0 %v727
      %v832 = vpop.f32.mrf.mxu0
      %v833 = vadd.f32 %v640, %v832
      %v834 = vpop.f32.mrf.mxu0
      %v835 = vpop.f32.mrf.mxu0
      %v836 = vadd.f32 %v643, %v835
      %v837 = vpop.f32.mrf.mxu0
      %838 = vmatprep.mubr.bf16.mxu0 0
      %839 = vmatmul.mubr.bf16.gmra.mxu0 %v728
      %v840 = vpop.f32.mrf.mxu0
      %v841 = vadd.f32 %v648, %v840
      %v842 = vpop.f32.mrf.mxu0
      %v843 = vpop.f32.mrf.mxu0
      %v844 = vadd.f32 %v651, %v843
      %v845 = vpop.f32.mrf.mxu0
      %846 = vmatprep.mubr.bf16.mxu0 0
      %847 = vmatmul.mubr.bf16.gmra.mxu0 %v729
      %v848 = vpop.f32.mrf.mxu0
      %v849 = vadd.f32 %v656, %v848
      %v850 = vpop.f32.mrf.mxu0
      %v851 = vpop.f32.mrf.mxu0
      %v852 = vadd.f32 %v659, %v851
      %v853 = vpop.f32.mrf.mxu0
      %854 = vmatprep.mubr.bf16.mxu0 0
      %855 = vmatmul.mubr.bf16.gmra.mxu0 %v730
      %v856 = vpop.f32.mrf.mxu0
      %v857 = vadd.f32 %v664, %v856
      %v858 = vpop.f32.mrf.mxu0
      %v859 = vpop.f32.mrf.mxu0
      %v860 = vadd.f32 %v667, %v859
      %v861 = vpop.f32.mrf.mxu0
      %862 = vmatprep.mubr.bf16.mxu0 0
      %863 = vmatmul.mubr.bf16.gmra.mxu0 %v731
      %v864 = vpop.f32.mrf.mxu0
      %v865 = vadd.f32 %v672, %v864
      %v866 = vpop.f32.mrf.mxu0
      %v867 = vpop.f32.mrf.mxu0
      %v868 = vadd.f32 %v675, %v867
      %v869 = vpop.f32.mrf.mxu0
      %870 = vmatprep.mubr.bf16.mxu0 0
      %871 = vmatmul.mubr.bf16.gmra.mxu0 %v732
      %v872 = vpop.f32.mrf.mxu0
      %v873 = vadd.f32 %v680, %v872
      %v874 = vpop.f32.mrf.mxu0
      %v875 = vpop.f32.mrf.mxu0
      %v876 = vadd.f32 %v683, %v875
      %v877 = vpop.f32.mrf.mxu0
      %878 = vmatprep.mubr.bf16.mxu0 0
      %879 = vmatmul.mubr.bf16.gmra.mxu0 %v733
      %v880 = vpop.f32.mrf.mxu0
      %v881 = vadd.f32 %v688, %v880
      %v882 = vpop.f32.mrf.mxu0
      %v883 = vpop.f32.mrf.mxu0
      %v884 = vadd.f32 %v691, %v883
      %v885 = vpop.f32.mrf.mxu0
      %886 = vdwg.mxu0
      %v887 = vld [vmem:[%s6] sm:$0x1]
      %v889 = vlaneseq
      %v890 = vshrl.u32 %v889, 7
      %v891 = vsub.s32 0, %v890
      %v892 = vrot.slane %v887, %v891
      %v894 = vadd.f32 %v825, %v892
      %v895 = vadd.f32 %v828, %v892
      %v896 = vadd.f32 %v833, %v892
      %v897 = vadd.f32 %v836, %v892
      %v898 = vadd.f32 %v841, %v892
      %v899 = vadd.f32 %v844, %v892
      %v900 = vadd.f32 %v849, %v892
      %v901 = vadd.f32 %v852, %v892
      %v902 = vadd.f32 %v857, %v892
      %v903 = vadd.f32 %v860, %v892
      %v904 = vadd.f32 %v865, %v892
      %v905 = vadd.f32 %v868, %v892
      %v906 = vadd.f32 %v873, %v892
      %v907 = vadd.f32 %v876, %v892
      %v908 = vadd.f32 %v881, %v892
      %v909 = vadd.f32 %v884, %v892
      %v910 = vmax.f32 %v894, 0.0
      %v911 = vmax.f32 %v895, 0.0
      %v912 = vmax.f32 %v896, 0.0
      %v913 = vmax.f32 %v897, 0.0
      %v914 = vmax.f32 %v898, 0.0
      %v915 = vmax.f32 %v899, 0.0
      %v916 = vmax.f32 %v900, 0.0
      %v917 = vmax.f32 %v901, 0.0
      %v918 = vmax.f32 %v902, 0.0
      %v919 = vmax.f32 %v903, 0.0
      %v920 = vmax.f32 %v904, 0.0
      %v921 = vmax.f32 %v905, 0.0
      %v922 = vmax.f32 %v906, 0.0
      %v923 = vmax.f32 %v907, 0.0
      %v924 = vmax.f32 %v908, 0.0
      %v925 = vmax.f32 %v909, 0.0
      %v926 = vpack.c.bf16 %v911, %v910
      %v927 = vpack.c.bf16 %v913, %v912
      %v928 = vpack.c.bf16 %v915, %v914
      %v929 = vpack.c.bf16 %v917, %v916
      %v930 = vpack.c.bf16 %v919, %v918
      %v931 = vpack.c.bf16 %v921, %v920
      %v932 = vpack.c.bf16 %v923, %v922
      %v933 = vpack.c.bf16 %v925, %v924
      %v942 = vunpack.c.l.b16 %v926
      %v943 = vunpack.c.h.b16 %v926
      %v944 = vunpack.c.l.b16 %v927
      %v945 = vunpack.c.h.b16 %v927
      %v946 = vunpack.c.l.b16 %v928
      %v947 = vunpack.c.h.b16 %v928
      %v948 = vunpack.c.l.b16 %v929
      %v949 = vunpack.c.h.b16 %v929
      %v950 = vunpack.c.l.b16 %v930
      %v951 = vunpack.c.h.b16 %v930
      %v952 = vunpack.c.l.b16 %v931
      %v953 = vunpack.c.h.b16 %v931
      %v954 = vunpack.c.l.b16 %v932
      %v955 = vunpack.c.h.b16 %v932
      %v956 = vunpack.c.l.b16 %v933
      %v957 = vunpack.c.h.b16 %v933
      %v958 = vpack.c.b16 %v942, %v942
      %v959 = vpack.c.b16 %v943, %v943
      %v960 = vpack.c.b16 %v944, %v944
      %v961 = vpack.c.b16 %v945, %v945
      %v962 = vpack.c.b16 %v946, %v946
      %v963 = vpack.c.b16 %v947, %v947
      %v964 = vpack.c.b16 %v948, %v948
      %v965 = vpack.c.b16 %v949, %v949
      %v966 = vpack.c.b16 %v950, %v950
      %v967 = vpack.c.b16 %v951, %v951
      %v968 = vpack.c.b16 %v952, %v952
      %v969 = vpack.c.b16 %v953, %v953
      %v970 = vpack.c.b16 %v954, %v954
      %v971 = vpack.c.b16 %v955, %v955
      %v972 = vpack.c.b16 %v956, %v956
      %v973 = vpack.c.b16 %v957, %v957
      %990 = vst [vmem:[#allocation9] sm:$0xf] %v958
      %991 = vst [vmem:[#allocation9 + $0x4] sm:$0xf] %v959
      %992 = vst [vmem:[#allocation9 + $0x8] sm:$0xf] %v960
      %993 = vst [vmem:[#allocation9 + $0xc] sm:$0xf] %v961
      %994 = vst [vmem:[#allocation9 + $0x10] sm:$0xf] %v962
      %995 = vst [vmem:[#allocation9 + $0x14] sm:$0xf] %v963
      %996 = vst [vmem:[#allocation9 + $0x18] sm:$0xf] %v964
      %997 = vst [vmem:[#allocation9 + $0x1c] sm:$0xf] %v965
      %998 = vst [vmem:[#allocation9 + $0x20] sm:$0xf] %v966
      %999 = vst [vmem:[#allocation9 + $0x24] sm:$0xf] %v967
      %1000 = vst [vmem:[#allocation9 + $0x28] sm:$0xf] %v968
      %1001 = vst [vmem:[#allocation9 + $0x2c] sm:$0xf] %v969
      %1002 = vst [vmem:[#allocation9 + $0x30] sm:$0xf] %v970
      %1003 = vst [vmem:[#allocation9 + $0x34] sm:$0xf] %v971
      %1004 = vst [vmem:[#allocation9 + $0x38] sm:$0xf] %v972
      %1005 = vst [vmem:[#allocation9 + $0x3c] sm:$0xf] %v973
    $region49: #{tpu_custom_call.1} parent=1 // pred_fallthru
      _
    // Predicated region
    $region50: #{tpu_custom_call.1} parent=1 // pred_check
      _
    $region51: #{tpu_custom_call.1} parent=1 // pred_check_branch
      %1007 = sbr.rel (0) target = $region53
    $region52: #{tpu_custom_call.1} parent=1 // pred_region
      %s1009 = ssub.s32 1024, 1024
      %1010 = vsyncadd [#allocation5], %s1009
      %s1011 = sshll.u32 [#allocation9], 4
      %s1012 = int_to_ptr.vmem [resolvable:$true] %s1011
      %1017 = dma.vmem_to_hbm [thread:$0]  %s1012, 1024, %s7, [#allocation5], 64, 64, 4
    $region53: #{tpu_custom_call.1} parent=1 // pred_fallthru
      _
    // Predicated region
    $region54: #{tpu_custom_call.1} parent=1 // pred_check
      _
    $region55: #{tpu_custom_call.1} parent=1 // pred_check_branch
      %1019 = sbr.rel (0) target = $region57
    $region56: #{tpu_custom_call.1} parent=1 // pred_region
      %1020 = dma.done [#allocation5], 1024
    $region57: #{tpu_custom_call.1} parent=1 // pred_fallthru
      _
    %1021 = vsyncpa [#allocation4], 1
    %1022 = vsyncpa [#allocation7], 1
    %1023 = vsyncpa [#allocation5], 1

// kernel: tpu_custom_call.1
$region0: #{tpu_custom_call.1}
  #allocation0 [shape = 'u32[]', space=smem, size = 0x4, offset = 0x4, fixed_abs, tag = 'smem constant byte address 0x4 - core index']
  #allocation1 [shape = 'u32[144,128]{1,0:T(1,128)}', space=vmem, size = 0x12000, scoped, tag = 'internal scratch']
  #allocation2 [shape = 'f32[128,128]{1,0:T(8,128)}', space=vmem, size = 0x10000, scoped, tag = 'scratch operand']
  %s0 = inlined_call_operand.vmem [shape: bf16[128,128], index: 0, kind: input, shape index: {}]
  %s1 = inlined_call_operand.vmem [shape: bf16[128,128], index: 1, kind: input, shape index: {}]
  %s2 = inlined_call_operand.hbm [shape: bf16[128,128], index: 2, kind: input, shape index: {}]
  %s3 = inlined_call_operand.vmem [shape: f32[128,1], index: 3, kind: input, shape index: {}]
  %s4 = inlined_call_operand.hbm [shape: bf16[128,128], index: 4, kind: input, shape index: {}]
  %s5 = inlined_call_operand.hbm [shape: bf16[128,128], index: 5, kind: input, shape index: {}]
  %s6 = inlined_call_operand.vmem [shape: f32[1,128], index: 6, kind: input, shape index: {}]
  %s7 = inlined_call_operand.hbm [shape: bf16[128,128], index: 7, kind: output, shape index: {}]
  %s8 = sld [smem:[#allocation0]]
  $region58: #{tpu_custom_call.1} parent=0
    _
  %s10 = ssub.s32 1, %s8
  %s11 = scalar_select 0, %s10, %s8
  $region1: #{tpu_custom_call.1} parent=0
    #allocation3 [shape = 'u8[32768]{0}', space=vmem, size = 0x8000, scoped, tag = 'input window, operand 2, single buffered']
    #allocation4 [shape = 's32[1]{0}', space=sflag, size = 0x4, scoped, tag = 'scoped memory for tpu_custom_call.1']
    #allocation5 [shape = 's32[1]{0}', space=sflag, size = 0x4, scoped, tag = 'scoped memory for tpu_custom_call.1']
    #allocation6 [shape = 'u8[32768]{0}', space=vmem, size = 0x8000, scoped, tag = 'input window, operand 4, single buffered']
    #allocation7 [shape = 's32[1]{0}', space=sflag, size = 0x4, scoped, tag = 'scoped memory for tpu_custom_call.1']
    #allocation8 [shape = 'u8[32768]{0}', space=vmem, size = 0x8000, scoped, tag = 'input window, operand 5, single buffered']
    #allocation9 [shape = 'u8[32768]{0}', space=vmem, size = 0x8000, scoped, tag = 'output window, operand 0, single buffered']
    %12 = vsyncpa [#allocation4], 0
    %13 = vsyncpa [#allocation7], 0
    %14 = vsyncpa [#allocation5], 0
    // Predicated region
    $region2: #{tpu_custom_call.1} parent=1 // pred_check
      _
    $region3: #{tpu_custom_call.1} parent=1 // pred_check_branch
      %16 = sbr.rel (0) target = $region5
    $region4: #{tpu_custom_call.1} parent=1 // pred_region
      _
    $region5: #{tpu_custom_call.1} parent=1 // pred_fallthru
      _
    // Predicated region
    $region6: #{tpu_custom_call.1} parent=1 // pred_check
      _
    $region7: #{tpu_custom_call.1} parent=1 // pred_check_branch
      %18 = sbr.rel (0) target = $region9
    $region8: #{tpu_custom_call.1} parent=1 // pred_region
      _
    $region9: #{tpu_custom_call.1} parent=1 // pred_fallthru
      _
    // Predicated region
    $region10: #{tpu_custom_call.1} parent=1 // pred_check
      _
    $region11: #{tpu_custom_call.1} parent=1 // pred_check_branch
      %20 = sbr.rel (0) target = $region13
    $region12: #{tpu_custom_call.1} parent=1 // pred_region
      %s22 = ssub.s32 1024, 1024
      %23 = vsyncadd [#allocation4], %s22
      %s24 = sshll.u32 [#allocation3], 4
      %s25 = int_to_ptr.vmem [resolvable:$true] %s24
      %30 = dma.hbm_to_vmem [thread:$0]  %s2, 1024, %s25, [#allocation4], 64, 64, 4
    $region13: #{tpu_custom_call.1} parent=1 // pred_fallthru
      _
    // Predicated region
    $region14: #{tpu_custom_call.1} parent=1 // pred_check
      _
    $region15: #{tpu_custom_call.1} parent=1 // pred_check_branch
      %32 = sbr.rel (0) target = $region17
    $region16: #{tpu_custom_call.1} parent=1 // pred_region
      _
    $region17: #{tpu_custom_call.1} parent=1 // pred_fallthru
      _
    // Predicated region
    $region18: #{tpu_custom_call.1} parent=1 // pred_check
      _
    $region19: #{tpu_custom_call.1} parent=1 // pred_check_branch
      %34 = sbr.rel (0) target = $region21
    $region20: #{tpu_custom_call.1} parent=1 // pred_region
      %s36 = ssub.s32 1024, 1024
      %37 = vsyncadd [#allocation7], %s36
      %s38 = sshll.u32 [#allocation6], 4
      %s39 = int_to_ptr.vmem [resolvable:$true] %s38
      %44 = dma.hbm_to_vmem [thread:$0]  %s4, 1024, %s39, [#allocation7], 64, 64, 4
    $region21: #{tpu_custom_call.1} parent=1 // pred_fallthru
      _
    // Predicated region
    $region22: #{tpu_custom_call.1} parent=1 // pred_check
      _
    $region23: #{tpu_custom_call.1} parent=1 // pred_check_branch
      %46 = sbr.rel (0) target = $region25
    $region24: #{tpu_custom_call.1} parent=1 // pred_region
      %s48 = ssub.s32 1024, 1024
      %49 = vsyncadd [#allocation7], %s48
      %s50 = sshll.u32 [#allocation8], 4
      %s51 = int_to_ptr.vmem [resolvable:$true] %s50
      %56 = dma.hbm_to_vmem [thread:$0]  %s5, 1024, %s51, [#allocation7], 64, 64, 4
    $region25: #{tpu_custom_call.1} parent=1 // pred_fallthru
      _
    // Predicated region
    $region26: #{tpu_custom_call.1} parent=1 // pred_check
      _
    $region27: #{tpu_custom_call.1} parent=1 // pred_check_branch
      %58 = sbr.rel (0) target = $region29
    $region28: #{tpu_custom_call.1} parent=1 // pred_region
      _
    $region29: #{tpu_custom_call.1} parent=1 // pred_fallthru
      _
    // Predicated region
    $region30: #{tpu_custom_call.1} parent=1 // pred_check
      _
    $region31: #{tpu_custom_call.1} parent=1 // pred_check_branch
      %60 = sbr.rel (0) target = $region33
    $region32: #{tpu_custom_call.1} parent=1 // pred_region
      %61 = dma.done [#allocation4], 1024
    $region33: #{tpu_custom_call.1} parent=1 // pred_fallthru
      _
    // Predicated region
    $region34: #{tpu_custom_call.1} parent=1 // pred_check
      _
    $region35: #{tpu_custom_call.1} parent=1 // pred_check_branch
      %63 = sbr.rel (0) target = $region37
    $region36: #{tpu_custom_call.1} parent=1 // pred_region
      %64 = dma.done [#allocation7], 1024
    $region37: #{tpu_custom_call.1} parent=1 // pred_fallthru
      _
    // Predicated region
    $region38: #{tpu_custom_call.1} parent=1 // pred_check
      _
    $region39: #{tpu_custom_call.1} parent=1 // pred_check_branch
      %66 = sbr.rel (0) target = $region41
    $region40: #{tpu_custom_call.1} parent=1 // pred_region
      %67 = dma.done [#allocation7], 1024
    $region41: #{tpu_custom_call.1} parent=1 // pred_fallthru
      _
    %p69 = scmp.eq.s32.totalorder 0, 0
    // Predicated region
    $region42: #{tpu_custom_call.1} parent=1 // pred_check
      %p70 = pneg %p69
    $region43: #{tpu_custom_call.1} parent=1 // pred_check_branch
      %72 = sbr.rel (%p70) target = $region45
    $region44: #{tpu_custom_call.1} parent=1 // pred_region
      %73 = vst [vmem:[#allocation2] sm:$0xff] 0.0
      %74 = vst [vmem:[#allocation2 + $0x8] sm:$0xff] 0.0
      %75 = vst [vmem:[#allocation2 + $0x10] sm:$0xff] 0.0
      %76 = vst [vmem:[#allocation2 + $0x18] sm:$0xff] 0.0
      %77 = vst [vmem:[#allocation2 + $0x20] sm:$0xff] 0.0
      %78 = vst [vmem:[#allocation2 + $0x28] sm:$0xff] 0.0
      %79 = vst [vmem:[#allocation2 + $0x30] sm:$0xff] 0.0
      %80 = vst [vmem:[#allocation2 + $0x38] sm:$0xff] 0.0
      %81 = vst [vmem:[#allocation2 + $0x40] sm:$0xff] 0.0
      %82 = vst [vmem:[#allocation2 + $0x48] sm:$0xff] 0.0
      %83 = vst [vmem:[#allocation2 + $0x50] sm:$0xff] 0.0
      %84 = vst [vmem:[#allocation2 + $0x58] sm:$0xff] 0.0
      %85 = vst [vmem:[#allocation2 + $0x60] sm:$0xff] 0.0
      %86 = vst [vmem:[#allocation2 + $0x68] sm:$0xff] 0.0
      %87 = vst [vmem:[#allocation2 + $0x70] sm:$0xff] 0.0
      %88 = vst [vmem:[#allocation2 + $0x78] sm:$0xff] 0.0
    $region45: #{tpu_custom_call.1} parent=1 // pred_fallthru
      _
    %v89 = vld [vmem:[#allocation2] sm:$0xff]
    %v90 = vld [vmem:[#allocation2 + $0x8] sm:$0xff]
    %v91 = vld [vmem:[#allocation2 + $0x10] sm:$0xff]
    %v92 = vld [vmem:[#allocation2 + $0x18] sm:$0xff]
    %v93 = vld [vmem:[#allocation2 + $0x20] sm:$0xff]
    %v94 = vld [vmem:[#allocation2 + $0x28] sm:$0xff]
    %v95 = vld [vmem:[#allocation2 + $0x30] sm:$0xff]
    %v96 = vld [vmem:[#allocation2 + $0x38] sm:$0xff]
    %v97 = vld [vmem:[#allocation2 + $0x40] sm:$0xff]
    %v98 = vld [vmem:[#allocation2 + $0x48] sm:$0xff]
    %v99 = vld [vmem:[#allocation2 + $0x50] sm:$0xff]
    %v100 = vld [vmem:[#allocation2 + $0x58] sm:$0xff]
    %v101 = vld [vmem:[#allocation2 + $0x60] sm:$0xff]
    %v102 = vld [vmem:[#allocation2 + $0x68] sm:$0xff]
    %v103 = vld [vmem:[#allocation2 + $0x70] sm:$0xff]
    %v104 = vld [vmem:[#allocation2 + $0x78] sm:$0xff]
    %v105 = vld [vmem:[%s0] sm:$0xf]
    %v106 = vld [vmem:[%s0 + $0x4] sm:$0xf]
    %v107 = vld [vmem:[%s0 + $0x8] sm:$0xf]
    %v108 = vld [vmem:[%s0 + $0xc] sm:$0xf]
    %v109 = vld [vmem:[%s0 + $0x10] sm:$0xf]
    %v110 = vld [vmem:[%s0 + $0x14] sm:$0xf]
    %v111 = vld [vmem:[%s0 + $0x18] sm:$0xf]
    %v112 = vld [vmem:[%s0 + $0x1c] sm:$0xf]
    %v113 = vld [vmem:[%s0 + $0x20] sm:$0xf]
    %v114 = vld [vmem:[%s0 + $0x24] sm:$0xf]
    %v115 = vld [vmem:[%s0 + $0x28] sm:$0xf]
    %v116 = vld [vmem:[%s0 + $0x2c] sm:$0xf]
    %v117 = vld [vmem:[%s0 + $0x30] sm:$0xf]
    %v118 = vld [vmem:[%s0 + $0x34] sm:$0xf]
    %v119 = vld [vmem:[%s0 + $0x38] sm:$0xf]
    %v120 = vld [vmem:[%s0 + $0x3c] sm:$0xf]
    %v121 = vld [vmem:[%s1] sm:$0xf]
    %v122 = vld [vmem:[%s1 + $0x4] sm:$0xf]
    %v123 = vld [vmem:[%s1 + $0x8] sm:$0xf]
    %v124 = vld [vmem:[%s1 + $0xc] sm:$0xf]
    %v125 = vld [vmem:[%s1 + $0x10] sm:$0xf]
    %v126 = vld [vmem:[%s1 + $0x14] sm:$0xf]
    %v127 = vld [vmem:[%s1 + $0x18] sm:$0xf]
    %v128 = vld [vmem:[%s1 + $0x1c] sm:$0xf]
    %v129 = vld [vmem:[%s1 + $0x20] sm:$0xf]
    %v130 = vld [vmem:[%s1 + $0x24] sm:$0xf]
    %v131 = vld [vmem:[%s1 + $0x28] sm:$0xf]
    %v132 = vld [vmem:[%s1 + $0x2c] sm:$0xf]
    %v133 = vld [vmem:[%s1 + $0x30] sm:$0xf]
    %v134 = vld [vmem:[%s1 + $0x34] sm:$0xf]
    %v135 = vld [vmem:[%s1 + $0x38] sm:$0xf]
    %v136 = vld [vmem:[%s1 + $0x3c] sm:$0xf]
    %v153 = vunpack.c.l.b16 %v105
    %v154 = vunpack.c.l.b16 %v106
    %v155 = vunpack.c.l.b16 %v107
    %v156 = vunpack.c.l.b16 %v108
    %v157 = vunpack.c.l.b16 %v109
    %v158 = vunpack.c.l.b16 %v110
    %v159 = vunpack.c.l.b16 %v111
    %v160 = vunpack.c.l.b16 %v112
    %v161 = vunpack.c.l.b16 %v113
    %v162 = vunpack.c.l.b16 %v114
    %v163 = vunpack.c.l.b16 %v115
    %v164 = vunpack.c.l.b16 %v116
    %v165 = vunpack.c.l.b16 %v117
    %v166 = vunpack.c.l.b16 %v118
    %v167 = vunpack.c.l.b16 %v119
    %v168 = vunpack.c.l.b16 %v120
    %v169 = vpack.c.b16 %v154, %v153
    %v170 = vpack.c.b16 %v156, %v155
    %v171 = vpack.c.b16 %v158, %v157
    %v172 = vpack.c.b16 %v160, %v159
    %v173 = vpack.c.b16 %v162, %v161
    %v174 = vpack.c.b16 %v164, %v163
    %v175 = vpack.c.b16 %v166, %v165
    %v176 = vpack.c.b16 %v168, %v167
    %v201 = vunpack.c.l.b16 %v121
    %v202 = vunpack.c.l.b16 %v122
    %v203 = vunpack.c.l.b16 %v123
    %v204 = vunpack.c.l.b16 %v124
    %v205 = vunpack.c.l.b16 %v125
    %v206 = vunpack.c.l.b16 %v126
    %v207 = vunpack.c.l.b16 %v127
    %v208 = vunpack.c.l.b16 %v128
    %v209 = vunpack.c.l.b16 %v129
    %v210 = vunpack.c.l.b16 %v130
    %v211 = vunpack.c.l.b16 %v131
    %v212 = vunpack.c.l.b16 %v132
    %v213 = vunpack.c.l.b16 %v133
    %v214 = vunpack.c.l.b16 %v134
    %v215 = vunpack.c.l.b16 %v135
    %v216 = vunpack.c.l.b16 %v136
    %v217 = vpack.c.b16 %v202, %v201
    %v218 = vpack.c.b16 %v204, %v203
    %v219 = vpack.c.b16 %v206, %v205
    %v220 = vpack.c.b16 %v208, %v207
    %v221 = vpack.c.b16 %v210, %v209
    %v222 = vpack.c.b16 %v212, %v211
    %v223 = vpack.c.b16 %v214, %v213
    %v224 = vpack.c.b16 %v216, %v215
    %233 = vmatprep.subr.bf16.mxu0 0
    %234 = vmatpush1.bf16.msra.mxu0 %v224
    %235 = vmatprep.subr.bf16.mxu0 0
    %236 = vmatpush1.bf16.msra.mxu0 %v223
    %237 = vmatprep.subr.bf16.mxu0 0
    %238 = vmatpush1.bf16.msra.mxu0 %v222
    %239 = vmatprep.subr.bf16.mxu0 0
    %240 = vmatpush1.bf16.msra.mxu0 %v221
    %241 = vmatprep.subr.bf16.mxu0 0
    %242 = vmatpush1.bf16.msra.mxu0 %v220
    %243 = vmatprep.subr.bf16.mxu0 0
    %244 = vmatpush1.bf16.msra.mxu0 %v219
    %245 = vmatprep.subr.bf16.mxu0 0
    %246 = vmatpush1.bf16.msra.mxu0 %v218
    %247 = vmatprep.subr.bf16.mxu0 0
    %248 = vmatpush1.bf16.msra.mxu0 %v217
    %249 = vmatprep.subr.bf16.mxu0 0
    %250 = vmatpush2.bf16.msra.mxu0 0
    %251 = vmatprep.subr.bf16.mxu0 0
    %252 = vmatpush2.bf16.msra.mxu0 0
    %253 = vmatprep.subr.bf16.mxu0 0
    %254 = vmatpush2.bf16.msra.mxu0 0
    %255 = vmatprep.subr.bf16.mxu0 0
    %256 = vmatpush2.bf16.msra.mxu0 0
    %257 = vmatprep.subr.bf16.mxu0 0
    %258 = vmatpush2.bf16.msra.mxu0 0
    %259 = vmatprep.subr.bf16.mxu0 0
    %260 = vmatpush2.bf16.msra.mxu0 0
    %261 = vmatprep.subr.bf16.mxu0 0
    %262 = vmatpush2.bf16.msra.mxu0 0
    %263 = vmatprep.subr.bf16.mxu0 0
    %264 = vmatpush2.bf16.msra.mxu0 0
    %265 = vmatprep.mubr.bf16.mxu0 0
    %266 = vmatmul.mubr.bf16.gmra.mxu0 %v169
    %v267 = vpop.f32.mrf.mxu0
    %v268 = vadd.f32 0.0, %v267
    %v269 = vpop.f32.mrf.mxu0
    %v270 = vpop.f32.mrf.mxu0
    %v271 = vadd.f32 0.0, %v270
    %v272 = vpop.f32.mrf.mxu0
    %273 = vmatprep.mubr.bf16.mxu0 0
    %274 = vmatmul.mubr.bf16.gmra.mxu0 %v170
    %v275 = vpop.f32.mrf.mxu0
    %v276 = vadd.f32 0.0, %v275
    %v277 = vpop.f32.mrf.mxu0
    %v278 = vpop.f32.mrf.mxu0
    %v279 = vadd.f32 0.0, %v278
    %v280 = vpop.f32.mrf.mxu0
    %281 = vmatprep.mubr.bf16.mxu0 0
    %282 = vmatmul.mubr.bf16.gmra.mxu0 %v171
    %v283 = vpop.f32.mrf.mxu0
    %v284 = vadd.f32 0.0, %v283
    %v285 = vpop.f32.mrf.mxu0
    %v286 = vpop.f32.mrf.mxu0
    %v287 = vadd.f32 0.0, %v286
    %v288 = vpop.f32.mrf.mxu0
    %289 = vmatprep.mubr.bf16.mxu0 0
    %290 = vmatmul.mubr.bf16.gmra.mxu0 %v172
    %v291 = vpop.f32.mrf.mxu0
    %v292 = vadd.f32 0.0, %v291
    %v293 = vpop.f32.mrf.mxu0
    %v294 = vpop.f32.mrf.mxu0
    %v295 = vadd.f32 0.0, %v294
    %v296 = vpop.f32.mrf.mxu0
    %297 = vmatprep.mubr.bf16.mxu0 0
    %298 = vmatmul.mubr.bf16.gmra.mxu0 %v173
    %v299 = vpop.f32.mrf.mxu0
    %v300 = vadd.f32 0.0, %v299
    %v301 = vpop.f32.mrf.mxu0
    %v302 = vpop.f32.mrf.mxu0
    %v303 = vadd.f32 0.0, %v302
    %v304 = vpop.f32.mrf.mxu0
    %305 = vmatprep.mubr.bf16.mxu0 0
    %306 = vmatmul.mubr.bf16.gmra.mxu0 %v174
    %v307 = vpop.f32.mrf.mxu0
    %v308 = vadd.f32 0.0, %v307
    %v309 = vpop.f32.mrf.mxu0
    %v310 = vpop.f32.mrf.mxu0
    %v311 = vadd.f32 0.0, %v310
    %v312 = vpop.f32.mrf.mxu0
    %313 = vmatprep.mubr.bf16.mxu0 0
    %314 = vmatmul.mubr.bf16.gmra.mxu0 %v175
    %v315 = vpop.f32.mrf.mxu0
    %v316 = vadd.f32 0.0, %v315
    %v317 = vpop.f32.mrf.mxu0
    %v318 = vpop.f32.mrf.mxu0
    %v319 = vadd.f32 0.0, %v318
    %v320 = vpop.f32.mrf.mxu0
    %321 = vmatprep.mubr.bf16.mxu0 0
    %322 = vmatmul.mubr.bf16.gmra.mxu0 %v176
    %v323 = vpop.f32.mrf.mxu0
    %v324 = vadd.f32 0.0, %v323
    %v325 = vpop.f32.mrf.mxu0
    %v326 = vpop.f32.mrf.mxu0
    %v327 = vadd.f32 0.0, %v326
    %v328 = vpop.f32.mrf.mxu0
    %329 = vdwg.mxu0
    %v330 = vadd.f32 %v89, %v268
    %v331 = vadd.f32 %v90, %v271
    %v332 = vadd.f32 %v91, %v276
    %v333 = vadd.f32 %v92, %v279
    %v334 = vadd.f32 %v93, %v284
    %v335 = vadd.f32 %v94, %v287
    %v336 = vadd.f32 %v95, %v292
    %v337 = vadd.f32 %v96, %v295
    %v338 = vadd.f32 %v97, %v300
    %v339 = vadd.f32 %v98, %v303
    %v340 = vadd.f32 %v99, %v308
    %v341 = vadd.f32 %v100, %v311
    %v342 = vadd.f32 %v101, %v316
    %v343 = vadd.f32 %v102, %v319
    %v344 = vadd.f32 %v103, %v324
    %v345 = vadd.f32 %v104, %v327
    %346 = vst [vmem:[#allocation2] sm:$0xff] %v330
    %347 = vst [vmem:[#allocation2 + $0x8] sm:$0xff] %v331
    %348 = vst [vmem:[#allocation2 + $0x10] sm:$0xff] %v332
    %349 = vst [vmem:[#allocation2 + $0x18] sm:$0xff] %v333
    %350 = vst [vmem:[#allocation2 + $0x20] sm:$0xff] %v334
    %351 = vst [vmem:[#allocation2 + $0x28] sm:$0xff] %v335
    %352 = vst [vmem:[#allocation2 + $0x30] sm:$0xff] %v336
    %353 = vst [vmem:[#allocation2 + $0x38] sm:$0xff] %v337
    %354 = vst [vmem:[#allocation2 + $0x40] sm:$0xff] %v338
    %355 = vst [vmem:[#allocation2 + $0x48] sm:$0xff] %v339
    %356 = vst [vmem:[#allocation2 + $0x50] sm:$0xff] %v340
    %357 = vst [vmem:[#allocation2 + $0x58] sm:$0xff] %v341
    %358 = vst [vmem:[#allocation2 + $0x60] sm:$0xff] %v342
    %359 = vst [vmem:[#allocation2 + $0x68] sm:$0xff] %v343
    %360 = vst [vmem:[#allocation2 + $0x70] sm:$0xff] %v344
    %361 = vst [vmem:[#allocation2 + $0x78] sm:$0xff] %v345
    // Predicated region
    $region46: #{tpu_custom_call.1} parent=1 // pred_check
      %p362 = pneg %p69
    $region47: #{tpu_custom_call.1} parent=1 // pred_check_branch
      %364 = sbr.rel (%p362) target = $region49
    $region48: #{tpu_custom_call.1} parent=1 // pred_region
      %v365 = vld [vmem:[#allocation2] sm:$0xff]
      %v366 = vld [vmem:[#allocation2 + $0x8] sm:$0xff]
      %v367 = vld [vmem:[#allocation2 + $0x10] sm:$0xff]
      %v368 = vld [vmem:[#allocation2 + $0x18] sm:$0xff]
      %v369 = vld [vmem:[#allocation2 + $0x20] sm:$0xff]
      %v370 = vld [vmem:[#allocation2 + $0x28] sm:$0xff]
      %v371 = vld [vmem:[#allocation2 + $0x30] sm:$0xff]
      %v372 = vld [vmem:[#allocation2 + $0x38] sm:$0xff]
      %v373 = vld [vmem:[#allocation2 + $0x40] sm:$0xff]
      %v374 = vld [vmem:[#allocation2 + $0x48] sm:$0xff]
      %v375 = vld [vmem:[#allocation2 + $0x50] sm:$0xff]
      %v376 = vld [vmem:[#allocation2 + $0x58] sm:$0xff]
      %v377 = vld [vmem:[#allocation2 + $0x60] sm:$0xff]
      %v378 = vld [vmem:[#allocation2 + $0x68] sm:$0xff]
      %v379 = vld [vmem:[#allocation2 + $0x70] sm:$0xff]
      %v380 = vld [vmem:[#allocation2 + $0x78] sm:$0xff]
      %v381 = vld [vmem:[%s3] sm:$0xff]
      %v382 = vld [vmem:[%s3 + $0x8] sm:$0xff]
      %v383 = vld [vmem:[%s3 + $0x10] sm:$0xff]
      %v384 = vld [vmem:[%s3 + $0x18] sm:$0xff]
      %v385 = vld [vmem:[%s3 + $0x20] sm:$0xff]
      %v386 = vld [vmem:[%s3 + $0x28] sm:$0xff]
      %v387 = vld [vmem:[%s3 + $0x30] sm:$0xff]
      %v388 = vld [vmem:[%s3 + $0x38] sm:$0xff]
      %v389 = vld [vmem:[%s3 + $0x40] sm:$0xff]
      %v390 = vld [vmem:[%s3 + $0x48] sm:$0xff]
      %v391 = vld [vmem:[%s3 + $0x50] sm:$0xff]
      %v392 = vld [vmem:[%s3 + $0x58] sm:$0xff]
      %v393 = vld [vmem:[%s3 + $0x60] sm:$0xff]
      %v394 = vld [vmem:[%s3 + $0x68] sm:$0xff]
      %v395 = vld [vmem:[%s3 + $0x70] sm:$0xff]
      %v396 = vld [vmem:[%s3 + $0x78] sm:$0xff]
      %398 = vset.pattern.permute.xlu0 0
      %399 = vperm.xlu0 %398, %v381
      %v400 = vpop.permute.xlu0 %399
      %403 = vset.pattern.permute.xlu0 0
      %404 = vperm.xlu0 %403, %v382
      %v405 = vpop.permute.xlu0 %404
      %408 = vset.pattern.permute.xlu0 0
      %409 = vperm.xlu0 %408, %v383
      %v410 = vpop.permute.xlu0 %409
      %413 = vset.pattern.permute.xlu0 0
      %414 = vperm.xlu0 %413, %v384
      %v415 = vpop.permute.xlu0 %414
      %418 = vset.pattern.permute.xlu0 0
      %419 = vperm.xlu0 %418, %v385
      %v420 = vpop.permute.xlu0 %419
      %423 = vset.pattern.permute.xlu0 0
      %424 = vperm.xlu0 %423, %v386
      %v425 = vpop.permute.xlu0 %424
      %428 = vset.pattern.permute.xlu0 0
      %429 = vperm.xlu0 %428, %v387
      %v430 = vpop.permute.xlu0 %429
      %433 = vset.pattern.permute.xlu0 0
      %434 = vperm.xlu0 %433, %v388
      %v435 = vpop.permute.xlu0 %434
      %438 = vset.pattern.permute.xlu0 0
      %439 = vperm.xlu0 %438, %v389
      %v440 = vpop.permute.xlu0 %439
      %443 = vset.pattern.permute.xlu0 0
      %444 = vperm.xlu0 %443, %v390
      %v445 = vpop.permute.xlu0 %444
      %448 = vset.pattern.permute.xlu0 0
      %449 = vperm.xlu0 %448, %v391
      %v450 = vpop.permute.xlu0 %449
      %453 = vset.pattern.permute.xlu0 0
      %454 = vperm.xlu0 %453, %v392
      %v455 = vpop.permute.xlu0 %454
      %458 = vset.pattern.permute.xlu0 0
      %459 = vperm.xlu0 %458, %v393
      %v460 = vpop.permute.xlu0 %459
      %463 = vset.pattern.permute.xlu0 0
      %464 = vperm.xlu0 %463, %v394
      %v465 = vpop.permute.xlu0 %464
      %468 = vset.pattern.permute.xlu0 0
      %469 = vperm.xlu0 %468, %v395
      %v470 = vpop.permute.xlu0 %469
      %473 = vset.pattern.permute.xlu0 0
      %474 = vperm.xlu0 %473, %v396
      %v475 = vpop.permute.xlu0 %474
      %v477 = vmul.f32 %v365, %v400
      %v478 = vmul.f32 %v366, %v405
      %v479 = vmul.f32 %v367, %v410
      %v480 = vmul.f32 %v368, %v415
      %v481 = vmul.f32 %v369, %v420
      %v482 = vmul.f32 %v370, %v425
      %v483 = vmul.f32 %v371, %v430
      %v484 = vmul.f32 %v372, %v435
      %v485 = vmul.f32 %v373, %v440
      %v486 = vmul.f32 %v374, %v445
      %v487 = vmul.f32 %v375, %v450
      %v488 = vmul.f32 %v376, %v455
      %v489 = vmul.f32 %v377, %v460
      %v490 = vmul.f32 %v378, %v465
      %v491 = vmul.f32 %v379, %v470
      %v492 = vmul.f32 %v380, %v475
      %v493 = vld [vmem:[#allocation3] sm:$0xf]
      %v494 = vld [vmem:[#allocation3 + $0x4] sm:$0xf]
      %v495 = vld [vmem:[#allocation3 + $0x8] sm:$0xf]
      %v496 = vld [vmem:[#allocation3 + $0xc] sm:$0xf]
      %v497 = vld [vmem:[#allocation3 + $0x10] sm:$0xf]
      %v498 = vld [vmem:[#allocation3 + $0x14] sm:$0xf]
      %v499 = vld [vmem:[#allocation3 + $0x18] sm:$0xf]
      %v500 = vld [vmem:[#allocation3 + $0x1c] sm:$0xf]
      %v501 = vld [vmem:[#allocation3 + $0x20] sm:$0xf]
      %v502 = vld [vmem:[#allocation3 + $0x24] sm:$0xf]
      %v503 = vld [vmem:[#allocation3 + $0x28] sm:$0xf]
      %v504 = vld [vmem:[#allocation3 + $0x2c] sm:$0xf]
      %v505 = vld [vmem:[#allocation3 + $0x30] sm:$0xf]
      %v506 = vld [vmem:[#allocation3 + $0x34] sm:$0xf]
      %v507 = vld [vmem:[#allocation3 + $0x38] sm:$0xf]
      %v508 = vld [vmem:[#allocation3 + $0x3c] sm:$0xf]
      %v509 = vld [vmem:[#allocation6] sm:$0xf]
      %v510 = vld [vmem:[#allocation6 + $0x4] sm:$0xf]
      %v511 = vld [vmem:[#allocation6 + $0x8] sm:$0xf]
      %v512 = vld [vmem:[#allocation6 + $0xc] sm:$0xf]
      %v513 = vld [vmem:[#allocation6 + $0x10] sm:$0xf]
      %v514 = vld [vmem:[#allocation6 + $0x14] sm:$0xf]
      %v515 = vld [vmem:[#allocation6 + $0x18] sm:$0xf]
      %v516 = vld [vmem:[#allocation6 + $0x1c] sm:$0xf]
      %v517 = vld [vmem:[#allocation6 + $0x20] sm:$0xf]
      %v518 = vld [vmem:[#allocation6 + $0x24] sm:$0xf]
      %v519 = vld [vmem:[#allocation6 + $0x28] sm:$0xf]
      %v520 = vld [vmem:[#allocation6 + $0x2c] sm:$0xf]
      %v521 = vld [vmem:[#allocation6 + $0x30] sm:$0xf]
      %v522 = vld [vmem:[#allocation6 + $0x34] sm:$0xf]
      %v523 = vld [vmem:[#allocation6 + $0x38] sm:$0xf]
      %v524 = vld [vmem:[#allocation6 + $0x3c] sm:$0xf]
      %v525 = vpack.c.bf16 %v478, %v477
      %v526 = vpack.c.bf16 %v480, %v479
      %v527 = vpack.c.bf16 %v482, %v481
      %v528 = vpack.c.bf16 %v484, %v483
      %v529 = vpack.c.bf16 %v486, %v485
      %v530 = vpack.c.bf16 %v488, %v487
      %v531 = vpack.c.bf16 %v490, %v489
      %v532 = vpack.c.bf16 %v492, %v491
      %v533 = vld [vmem:[#allocation8] sm:$0xf]
      %v534 = vld [vmem:[#allocation8 + $0x4] sm:$0xf]
      %v535 = vld [vmem:[#allocation8 + $0x8] sm:$0xf]
      %v536 = vld [vmem:[#allocation8 + $0xc] sm:$0xf]
      %v537 = vld [vmem:[#allocation8 + $0x10] sm:$0xf]
      %v538 = vld [vmem:[#allocation8 + $0x14] sm:$0xf]
      %v539 = vld [vmem:[#allocation8 + $0x18] sm:$0xf]
      %v540 = vld [vmem:[#allocation8 + $0x1c] sm:$0xf]
      %v541 = vld [vmem:[#allocation8 + $0x20] sm:$0xf]
      %v542 = vld [vmem:[#allocation8 + $0x24] sm:$0xf]
      %v543 = vld [vmem:[#allocation8 + $0x28] sm:$0xf]
      %v544 = vld [vmem:[#allocation8 + $0x2c] sm:$0xf]
      %v545 = vld [vmem:[#allocation8 + $0x30] sm:$0xf]
      %v546 = vld [vmem:[#allocation8 + $0x34] sm:$0xf]
      %v547 = vld [vmem:[#allocation8 + $0x38] sm:$0xf]
      %v548 = vld [vmem:[#allocation8 + $0x3c] sm:$0xf]
      %v565 = vunpack.c.l.b16 %v533
      %v566 = vunpack.c.l.b16 %v534
      %v567 = vunpack.c.l.b16 %v535
      %v568 = vunpack.c.l.b16 %v536
      %v569 = vunpack.c.l.b16 %v537
      %v570 = vunpack.c.l.b16 %v538
      %v571 = vunpack.c.l.b16 %v539
      %v572 = vunpack.c.l.b16 %v540
      %v573 = vunpack.c.l.b16 %v541
      %v574 = vunpack.c.l.b16 %v542
      %v575 = vunpack.c.l.b16 %v543
      %v576 = vunpack.c.l.b16 %v544
      %v577 = vunpack.c.l.b16 %v545
      %v578 = vunpack.c.l.b16 %v546
      %v579 = vunpack.c.l.b16 %v547
      %v580 = vunpack.c.l.b16 %v548
      %v581 = vpack.c.b16 %v566, %v565
      %v582 = vpack.c.b16 %v568, %v567
      %v583 = vpack.c.b16 %v570, %v569
      %v584 = vpack.c.b16 %v572, %v571
      %v585 = vpack.c.b16 %v574, %v573
      %v586 = vpack.c.b16 %v576, %v575
      %v587 = vpack.c.b16 %v578, %v577
      %v588 = vpack.c.b16 %v580, %v579
      %597 = vmatprep.subr.bf16.mxu0 0
      %598 = vmatpush1.bf16.msra.mxu0 %v588
      %599 = vmatprep.subr.bf16.mxu0 0
      %600 = vmatpush1.bf16.msra.mxu0 %v587
      %601 = vmatprep.subr.bf16.mxu0 0
      %602 = vmatpush1.bf16.msra.mxu0 %v586
      %603 = vmatprep.subr.bf16.mxu0 0
      %604 = vmatpush1.bf16.msra.mxu0 %v585
      %605 = vmatprep.subr.bf16.mxu0 0
      %606 = vmatpush1.bf16.msra.mxu0 %v584
      %607 = vmatprep.subr.bf16.mxu0 0
      %608 = vmatpush1.bf16.msra.mxu0 %v583
      %609 = vmatprep.subr.bf16.mxu0 0
      %610 = vmatpush1.bf16.msra.mxu0 %v582
      %611 = vmatprep.subr.bf16.mxu0 0
      %612 = vmatpush1.bf16.msra.mxu0 %v581
      %613 = vmatprep.subr.bf16.mxu0 0
      %614 = vmatpush2.bf16.msra.mxu0 0
      %615 = vmatprep.subr.bf16.mxu0 0
      %616 = vmatpush2.bf16.msra.mxu0 0
      %617 = vmatprep.subr.bf16.mxu0 0
      %618 = vmatpush2.bf16.msra.mxu0 0
      %619 = vmatprep.subr.bf16.mxu0 0
      %620 = vmatpush2.bf16.msra.mxu0 0
      %621 = vmatprep.subr.bf16.mxu0 0
      %622 = vmatpush2.bf16.msra.mxu0 0
      %623 = vmatprep.subr.bf16.mxu0 0
      %624 = vmatpush2.bf16.msra.mxu0 0
      %625 = vmatprep.subr.bf16.mxu0 0
      %626 = vmatpush2.bf16.msra.mxu0 0
      %627 = vmatprep.subr.bf16.mxu0 0
      %628 = vmatpush2.bf16.msra.mxu0 0
      %629 = vmatprep.mubr.bf16.mxu0 0
      %630 = vmatmul.mubr.bf16.gmra.mxu0 %v525
      %v631 = vpop.f32.mrf.mxu0
      %v632 = vadd.f32 0.0, %v631
      %v633 = vpop.f32.mrf.mxu0
      %v634 = vpop.f32.mrf.mxu0
      %v635 = vadd.f32 0.0, %v634
      %v636 = vpop.f32.mrf.mxu0
      %637 = vmatprep.mubr.bf16.mxu0 0
      %638 = vmatmul.mubr.bf16.gmra.mxu0 %v526
      %v639 = vpop.f32.mrf.mxu0
      %v640 = vadd.f32 0.0, %v639
      %v641 = vpop.f32.mrf.mxu0
      %v642 = vpop.f32.mrf.mxu0
      %v643 = vadd.f32 0.0, %v642
      %v644 = vpop.f32.mrf.mxu0
      %645 = vmatprep.mubr.bf16.mxu0 0
      %646 = vmatmul.mubr.bf16.gmra.mxu0 %v527
      %v647 = vpop.f32.mrf.mxu0
      %v648 = vadd.f32 0.0, %v647
      %v649 = vpop.f32.mrf.mxu0
      %v650 = vpop.f32.mrf.mxu0
      %v651 = vadd.f32 0.0, %v650
      %v652 = vpop.f32.mrf.mxu0
      %653 = vmatprep.mubr.bf16.mxu0 0
      %654 = vmatmul.mubr.bf16.gmra.mxu0 %v528
      %v655 = vpop.f32.mrf.mxu0
      %v656 = vadd.f32 0.0, %v655
      %v657 = vpop.f32.mrf.mxu0
      %v658 = vpop.f32.mrf.mxu0
      %v659 = vadd.f32 0.0, %v658
      %v660 = vpop.f32.mrf.mxu0
      %661 = vmatprep.mubr.bf16.mxu0 0
      %662 = vmatmul.mubr.bf16.gmra.mxu0 %v529
      %v663 = vpop.f32.mrf.mxu0
      %v664 = vadd.f32 0.0, %v663
      %v665 = vpop.f32.mrf.mxu0
      %v666 = vpop.f32.mrf.mxu0
      %v667 = vadd.f32 0.0, %v666
      %v668 = vpop.f32.mrf.mxu0
      %669 = vmatprep.mubr.bf16.mxu0 0
      %670 = vmatmul.mubr.bf16.gmra.mxu0 %v530
      %v671 = vpop.f32.mrf.mxu0
      %v672 = vadd.f32 0.0, %v671
      %v673 = vpop.f32.mrf.mxu0
      %v674 = vpop.f32.mrf.mxu0
      %v675 = vadd.f32 0.0, %v674
      %v676 = vpop.f32.mrf.mxu0
      %677 = vmatprep.mubr.bf16.mxu0 0
      %678 = vmatmul.mubr.bf16.gmra.mxu0 %v531
      %v679 = vpop.f32.mrf.mxu0
      %v680 = vadd.f32 0.0, %v679
      %v681 = vpop.f32.mrf.mxu0
      %v682 = vpop.f32.mrf.mxu0
      %v683 = vadd.f32 0.0, %v682
      %v684 = vpop.f32.mrf.mxu0
      %685 = vmatprep.mubr.bf16.mxu0 0
      %686 = vmatmul.mubr.bf16.gmra.mxu0 %v532
      %v687 = vpop.f32.mrf.mxu0
      %v688 = vadd.f32 0.0, %v687
      %v689 = vpop.f32.mrf.mxu0
      %v690 = vpop.f32.mrf.mxu0
      %v691 = vadd.f32 0.0, %v690
      %v692 = vpop.f32.mrf.mxu0
      %693 = vdwg.mxu0
      %v710 = vunpack.c.l.b16 %v493
      %v711 = vunpack.c.l.b16 %v494
      %v712 = vunpack.c.l.b16 %v495
      %v713 = vunpack.c.l.b16 %v496
      %v714 = vunpack.c.l.b16 %v497
      %v715 = vunpack.c.l.b16 %v498
      %v716 = vunpack.c.l.b16 %v499
      %v717 = vunpack.c.l.b16 %v500
      %v718 = vunpack.c.l.b16 %v501
      %v719 = vunpack.c.l.b16 %v502
      %v720 = vunpack.c.l.b16 %v503
      %v721 = vunpack.c.l.b16 %v504
      %v722 = vunpack.c.l.b16 %v505
      %v723 = vunpack.c.l.b16 %v506
      %v724 = vunpack.c.l.b16 %v507
      %v725 = vunpack.c.l.b16 %v508
      %v726 = vpack.c.b16 %v711, %v710
      %v727 = vpack.c.b16 %v713, %v712
      %v728 = vpack.c.b16 %v715, %v714
      %v729 = vpack.c.b16 %v717, %v716
      %v730 = vpack.c.b16 %v719, %v718
      %v731 = vpack.c.b16 %v721, %v720
      %v732 = vpack.c.b16 %v723, %v722
      %v733 = vpack.c.b16 %v725, %v724
      %v758 = vunpack.c.l.b16 %v509
      %v759 = vunpack.c.l.b16 %v510
      %v760 = vunpack.c.l.b16 %v511
      %v761 = vunpack.c.l.b16 %v512
      %v762 = vunpack.c.l.b16 %v513
      %v763 = vunpack.c.l.b16 %v514
      %v764 = vunpack.c.l.b16 %v515
      %v765 = vunpack.c.l.b16 %v516
      %v766 = vunpack.c.l.b16 %v517
      %v767 = vunpack.c.l.b16 %v518
      %v768 = vunpack.c.l.b16 %v519
      %v769 = vunpack.c.l.b16 %v520
      %v770 = vunpack.c.l.b16 %v521
      %v771 = vunpack.c.l.b16 %v522
      %v772 = vunpack.c.l.b16 %v523
      %v773 = vunpack.c.l.b16 %v524
      %v774 = vpack.c.b16 %v759, %v758
      %v775 = vpack.c.b16 %v761, %v760
      %v776 = vpack.c.b16 %v763, %v762
      %v777 = vpack.c.b16 %v765, %v764
      %v778 = vpack.c.b16 %v767, %v766
      %v779 = vpack.c.b16 %v769, %v768
      %v780 = vpack.c.b16 %v771, %v770
      %v781 = vpack.c.b16 %v773, %v772
      %790 = vmatprep.subr.bf16.mxu0 0
      %791 = vmatpush1.bf16.msra.mxu0 %v781
      %792 = vmatprep.subr.bf16.mxu0 0
      %793 = vmatpush1.bf16.msra.mxu0 %v780
      %794 = vmatprep.subr.bf16.mxu0 0
      %795 = vmatpush1.bf16.msra.mxu0 %v779
      %796 = vmatprep.subr.bf16.mxu0 0
      %797 = vmatpush1.bf16.msra.mxu0 %v778
      %798 = vmatprep.subr.bf16.mxu0 0
      %799 = vmatpush1.bf16.msra.mxu0 %v777
      %800 = vmatprep.subr.bf16.mxu0 0
      %801 = vmatpush1.bf16.msra.mxu0 %v776
      %802 = vmatprep.subr.bf16.mxu0 0
      %803 = vmatpush1.bf16.msra.mxu0 %v775
      %804 = vmatprep.subr.bf16.mxu0 0
      %805 = vmatpush1.bf16.msra.mxu0 %v774
      %806 = vmatprep.subr.bf16.mxu0 0
      %807 = vmatpush2.bf16.msra.mxu0 0
      %808 = vmatprep.subr.bf16.mxu0 0
      %809 = vmatpush2.bf16.msra.mxu0 0
      %810 = vmatprep.subr.bf16.mxu0 0
      %811 = vmatpush2.bf16.msra.mxu0 0
      %812 = vmatprep.subr.bf16.mxu0 0
      %813 = vmatpush2.bf16.msra.mxu0 0
      %814 = vmatprep.subr.bf16.mxu0 0
      %815 = vmatpush2.bf16.msra.mxu0 0
      %816 = vmatprep.subr.bf16.mxu0 0
      %817 = vmatpush2.bf16.msra.mxu0 0
      %818 = vmatprep.subr.bf16.mxu0 0
      %819 = vmatpush2.bf16.msra.mxu0 0
      %820 = vmatprep.subr.bf16.mxu0 0
      %821 = vmatpush2.bf16.msra.mxu0 0
      %822 = vmatprep.mubr.bf16.mxu0 0
      %823 = vmatmul.mubr.bf16.gmra.mxu0 %v726
      %v824 = vpop.f32.mrf.mxu0
      %v825 = vadd.f32 %v632, %v824
      %v826 = vpop.f32.mrf.mxu0
      %v827 = vpop.f32.mrf.mxu0
      %v828 = vadd.f32 %v635, %v827
      %v829 = vpop.f32.mrf.mxu0
      %830 = vmatprep.mubr.bf16.mxu0 0
      %831 = vmatmul.mubr.bf16.gmra.mxu0 %v727
      %v832 = vpop.f32.mrf.mxu0
      %v833 = vadd.f32 %v640, %v832
      %v834 = vpop.f32.mrf.mxu0
      %v835 = vpop.f32.mrf.mxu0
      %v836 = vadd.f32 %v643, %v835
      %v837 = vpop.f32.mrf.mxu0
      %838 = vmatprep.mubr.bf16.mxu0 0
      %839 = vmatmul.mubr.bf16.gmra.mxu0 %v728
      %v840 = vpop.f32.mrf.mxu0
      %v841 = vadd.f32 %v648, %v840
      %v842 = vpop.f32.mrf.mxu0
      %v843 = vpop.f32.mrf.mxu0
      %v844 = vadd.f32 %v651, %v843
      %v845 = vpop.f32.mrf.mxu0
      %846 = vmatprep.mubr.bf16.mxu0 0
      %847 = vmatmul.mubr.bf16.gmra.mxu0 %v729
      %v848 = vpop.f32.mrf.mxu0
      %v849 = vadd.f32 %v656, %v848
      %v850 = vpop.f32.mrf.mxu0
      %v851 = vpop.f32.mrf.mxu0
      %v852 = vadd.f32 %v659, %v851
      %v853 = vpop.f32.mrf.mxu0
      %854 = vmatprep.mubr.bf16.mxu0 0
      %855 = vmatmul.mubr.bf16.gmra.mxu0 %v730
      %v856 = vpop.f32.mrf.mxu0
      %v857 = vadd.f32 %v664, %v856
      %v858 = vpop.f32.mrf.mxu0
      %v859 = vpop.f32.mrf.mxu0
      %v860 = vadd.f32 %v667, %v859
      %v861 = vpop.f32.mrf.mxu0
      %862 = vmatprep.mubr.bf16.mxu0 0
      %863 = vmatmul.mubr.bf16.gmra.mxu0 %v731
      %v864 = vpop.f32.mrf.mxu0
      %v865 = vadd.f32 %v672, %v864
      %v866 = vpop.f32.mrf.mxu0
      %v867 = vpop.f32.mrf.mxu0
      %v868 = vadd.f32 %v675, %v867
      %v869 = vpop.f32.mrf.mxu0
      %870 = vmatprep.mubr.bf16.mxu0 0
      %871 = vmatmul.mubr.bf16.gmra.mxu0 %v732
      %v872 = vpop.f32.mrf.mxu0
      %v873 = vadd.f32 %v680, %v872
      %v874 = vpop.f32.mrf.mxu0
      %v875 = vpop.f32.mrf.mxu0
      %v876 = vadd.f32 %v683, %v875
      %v877 = vpop.f32.mrf.mxu0
      %878 = vmatprep.mubr.bf16.mxu0 0
      %879 = vmatmul.mubr.bf16.gmra.mxu0 %v733
      %v880 = vpop.f32.mrf.mxu0
      %v881 = vadd.f32 %v688, %v880
      %v882 = vpop.f32.mrf.mxu0
      %v883 = vpop.f32.mrf.mxu0
      %v884 = vadd.f32 %v691, %v883
      %v885 = vpop.f32.mrf.mxu0
      %886 = vdwg.mxu0
      %v887 = vld [vmem:[%s6] sm:$0x1]
      %v889 = vlaneseq
      %v890 = vshrl.u32 %v889, 7
      %v891 = vsub.s32 0, %v890
      %v892 = vrot.slane %v887, %v891
      %v894 = vadd.f32 %v825, %v892
      %v895 = vadd.f32 %v828, %v892
      %v896 = vadd.f32 %v833, %v892
      %v897 = vadd.f32 %v836, %v892
      %v898 = vadd.f32 %v841, %v892
      %v899 = vadd.f32 %v844, %v892
      %v900 = vadd.f32 %v849, %v892
      %v901 = vadd.f32 %v852, %v892
      %v902 = vadd.f32 %v857, %v892
      %v903 = vadd.f32 %v860, %v892
      %v904 = vadd.f32 %v865, %v892
      %v905 = vadd.f32 %v868, %v892
      %v906 = vadd.f32 %v873, %v892
      %v907 = vadd.f32 %v876, %v892
      %v908 = vadd.f32 %v881, %v892
      %v909 = vadd.f32 %v884, %v892
      %v910 = vmax.f32 %v894, 0.0
      %v911 = vmax.f32 %v895, 0.0
      %v912 = vmax.f32 %v896, 0.0
      %v913 = vmax.f32 %v897, 0.0
      %v914 = vmax.f32 %v898, 0.0
      %v915 = vmax.f32 %v899, 0.0
      %v916 = vmax.f32 %v900, 0.0
      %v917 = vmax.f32 %v901, 0.0
      %v918 = vmax.f32 %v902, 0.0
      %v919 = vmax.f32 %v903, 0.0
      %v920 = vmax.f32 %v904, 0.0
      %v921 = vmax.f32 %v905, 0.0
      %v922 = vmax.f32 %v906, 0.0
      %v923 = vmax.f32 %v907, 0.0
      %v924 = vmax.f32 %v908, 0.0
      %v925 = vmax.f32 %v909, 0.0
      %v926 = vpack.c.bf16 %v911, %v910
      %v927 = vpack.c.bf16 %v913, %v912
      %v928 = vpack.c.bf16 %v915, %v914
      %v929 = vpack.c.bf16 %v917, %v916
      %v930 = vpack.c.bf16 %v919, %v918
      %v931 = vpack.c.bf16 %v921, %v920
      %v932 = vpack.c.bf16 %v923, %v922
      %v933 = vpack.c.bf16 %v925, %v924
      %v942 = vunpack.c.l.b16 %v926
      %v943 = vunpack.c.h.b16 %v926
      %v944 = vunpack.c.l.b16 %v927
      %v945 = vunpack.c.h.b16 %v927
      %v946 = vunpack.c.l.b16 %v928
      %v947 = vunpack.c.h.b16 %v928
      %v948 = vunpack.c.l.b16 %v929
      %v949 = vunpack.c.h.b16 %v929
      %v950 = vunpack.c.l.b16 %v930
      %v951 = vunpack.c.h.b16 %v930
      %v952 = vunpack.c.l.b16 %v931
      %v953 = vunpack.c.h.b16 %v931
      %v954 = vunpack.c.l.b16 %v932
      %v955 = vunpack.c.h.b16 %v932
      %v956 = vunpack.c.l.b16 %v933
      %v957 = vunpack.c.h.b16 %v933
      %v958 = vpack.c.b16 %v942, %v942
      %v959 = vpack.c.b16 %v943, %v943
      %v960 = vpack.c.b16 %v944, %v944
      %v961 = vpack.c.b16 %v945, %v945
      %v962 = vpack.c.b16 %v946, %v946
      %v963 = vpack.c.b16 %v947, %v947
      %v964 = vpack.c.b16 %v948, %v948
      %v965 = vpack.c.b16 %v949, %v949
      %v966 = vpack.c.b16 %v950, %v950
      %v967 = vpack.c.b16 %v951, %v951
      %v968 = vpack.c.b16 %v952, %v952
      %v969 = vpack.c.b16 %v953, %v953
      %v970 = vpack.c.b16 %v954, %v954
      %v971 = vpack.c.b16 %v955, %v955
      %v972 = vpack.c.b16 %v956, %v956
      %v973 = vpack.c.b16 %v957, %v957
      %990 = vst [vmem:[#allocation9] sm:$0xf] %v958
      %991 = vst [vmem:[#allocation9 + $0x4] sm:$0xf] %v959
      %992 = vst [vmem:[#allocation9 + $0x8] sm:$0xf] %v960
      %993 = vst [vmem:[#allocation9 + $0xc] sm:$0xf] %v961
      %994 = vst [vmem:[#allocation9 + $0x10] sm:$0xf] %v962
      %995 = vst [vmem:[#allocation9 + $0x14] sm:$0xf] %v963
      %996 = vst [vmem:[#allocation9 + $0x18] sm:$0xf] %v964
      %997 = vst [vmem:[#allocation9 + $0x1c] sm:$0xf] %v965
      %998 = vst [vmem:[#allocation9 + $0x20] sm:$0xf] %v966
      %999 = vst [vmem:[#allocation9 + $0x24] sm:$0xf] %v967
      %1000 = vst [vmem:[#allocation9 + $0x28] sm:$0xf] %v968
      %1001 = vst [vmem:[#allocation9 + $0x2c] sm:$0xf] %v969
      %1002 = vst [vmem:[#allocation9 + $0x30] sm:$0xf] %v970
      %1003 = vst [vmem:[#allocation9 + $0x34] sm:$0xf] %v971
      %1004 = vst [vmem:[#allocation9 + $0x38] sm:$0xf] %v972
      %1005 = vst [vmem:[#allocation9 + $0x3c] sm:$0xf] %v973
    $region49: #{tpu_custom_call.1} parent=1 // pred_fallthru
      _
    // Predicated region
    $region50: #{tpu_custom_call.1} parent=1 // pred_check
      _
    $region51: #{tpu_custom_call.1} parent=1 // pred_check_branch
      %1007 = sbr.rel (0) target = $region53
    $region52: #{tpu_custom_call.1} parent=1 // pred_region
      %s1009 = ssub.s32 1024, 1024
      %1010 = vsyncadd [#allocation5], %s1009
      %s1011 = sshll.u32 [#allocation9], 4
      %s1012 = int_to_ptr.vmem [resolvable:$true] %s1011
      %1017 = dma.vmem_to_hbm [thread:$0]  %s1012, 1024, %s7, [#allocation5], 64, 64, 4
    $region53: #{tpu_custom_call.1} parent=1 // pred_fallthru
      _
    // Predicated region
    $region54: #{tpu_custom_call.1} parent=1 // pred_check
      _
    $region55: #{tpu_custom_call.1} parent=1 // pred_check_branch
      %1019 = sbr.rel (0) target = $region57
    $region56: #{tpu_custom_call.1} parent=1 // pred_region
      %1020 = dma.done [#allocation5], 1024
    $region57: #{tpu_custom_call.1} parent=1 // pred_fallthru
      _
    %1021 = vsyncpa [#allocation4], 1
    %1022 = vsyncpa [#allocation7], 1
    %1023 = vsyncpa [#allocation5], 1

</llo_original>
